<compile_context>
chip_gen: v7x
topology: tpu7x:2x2x1
jax: 0.10.0
libtpu: 0.0.40
codegen_flags: <defaults>
</compile_context>

<pallas_src>
import functools

import jax
import jax.numpy as jnp
from jax.experimental import pallas as pl
from jax.experimental.pallas import tpu as pltpu

_PAD_SENTINEL = 1e8  # padded coordinates; distances to/from them dwarf any real pair


def _round_up(x, m):
    return ((x + m - 1) // m) * m


def _chamfer_kernel(src_ref, dstt_ref, dsq_ref, *refs,
                    mode, tn, tm, n_tiles_per_split, compute_indices):
    if compute_indices:
        (loss_src_ref, idx1_ref, loss_dst_ref, idx2_ref,
         min_s_ref, arg_s_ref, ssq_ref) = refs
    else:
        loss_src_ref, loss_dst_ref, min_s_ref, ssq_ref = refs
        idx1_ref = idx2_ref = arg_s_ref = None

    sp = pl.program_id(1)            # N-split index (parallel; maps to 2nd TC on v7x)
    i = pl.program_id(2)             # N-tile index within split
    j = pl.program_id(3)             # M-tile index
    num_j = pl.num_programs(3)

    s = src_ref[0]                   # (tn, C)  points on sublanes, channels on lanes
    dt = dstt_ref[0]                 # (C, tm)  channels on sublanes, points on lanes
    C = s.shape[1]

    # ---------------- pairwise distance tile (tn, tm) ----------------
    if mode == 'l2':
        # ||s||^2 computed once per N-tile; ||d||^2 precomputed in the wrapper.
        @pl.when(j == 0)
        def _():
            ssq_ref[...] = jnp.sum(s * s, axis=1, keepdims=True)        # (tn, 1)
        cross = jnp.dot(s, dt, preferred_element_type=jnp.float32)      # MXU (tn, tm)
        dist = jnp.maximum(ssq_ref[...] + dsq_ref[0] - 2.0 * cross, 0.0)
    else:
        dist = jnp.zeros((tn, tm), jnp.float32)
        for c in range(C):           # static tiny channel loop (VPU)
            diff = s[:, c:c + 1] - dt[c:c + 1, :]                        # (tn,1)-(1,tm)
            if mode == 'l1':
                dist = dist + jnp.abs(diff)
            elif mode == 'smooth_l1':                                    # beta = 1.0
                ad = jnp.abs(diff)
                dist = dist + jnp.where(ad < 1.0, 0.5 * diff * diff, ad - 0.5)
            else:
                raise NotImplementedError(mode)

    # ---------------- src -> dst : reduce over M tiles (scratch accumulators) -------
    tile_min_s = jnp.min(dist, axis=1, keepdims=True)                   # (tn, 1)

    if compute_indices:
        col_ids = jax.lax.broadcasted_iota(jnp.int32, (1, tm), 1)
        tile_arg_s = jnp.min(jnp.where(dist == tile_min_s, col_ids, tm),
                             axis=1, keepdims=True) + j * tm            # (tn, 1)

        @pl.when(j == 0)
        def _():
            min_s_ref[...] = tile_min_s
            arg_s_ref[...] = tile_arg_s

        @pl.when(j > 0)
        def _():
            better = tile_min_s < min_s_ref[...]   # strict '<': earlier tile wins ties
            min_s_ref[...] = jnp.where(better, tile_min_s, min_s_ref[...])
            arg_s_ref[...] = jnp.where(better, tile_arg_s, arg_s_ref[...])

        @pl.when(j == num_j - 1)
        def _():
            loss_src_ref[...] = min_s_ref[...].reshape(1, tn, 1)
            idx1_ref[...] = arg_s_ref[...].reshape(1, tn, 1)
    else:
        @pl.when(j == 0)
        def _():
            min_s_ref[...] = tile_min_s

        @pl.when(j > 0)
        def _():
            min_s_ref[...] = jnp.minimum(min_s_ref[...], tile_min_s)

        @pl.when(j == num_j - 1)
        def _():
            loss_src_ref[...] = min_s_ref[...].reshape(1, tn, 1)

    # ---------------- dst -> src : reduce over N tiles (resident output blocks) -----
    tile_min_d = jnp.min(dist, axis=0, keepdims=True)                   # (1, tm)
    off = pl.multiple_of(j * tm, tm)

    if compute_indices:
        row_ids = jax.lax.broadcasted_iota(jnp.int32, (tn, 1), 0)
        row_base = (sp * n_tiles_per_split + i) * tn
        tile_arg_d = jnp.min(jnp.where(dist == tile_min_d, row_ids, tn),
                             axis=0, keepdims=True) + row_base          # (1, tm)

        @pl.when(i == 0)
        def _():
            loss_dst_ref[0, 0, :, pl.ds(off, tm)] = tile_min_d
            idx2_ref[0, 0, :, pl.ds(off, tm)] = tile_arg_d

        @pl.when(i > 0)
        def _():
            cur_val = loss_dst_ref[0, 0, :, pl.ds(off, tm)]
            cur_idx = idx2_ref[0, 0, :, pl.ds(off, tm)]
            better = tile_min_d < cur_val          # strict '<': smaller src index on tie
            loss_dst_ref[0, 0, :, pl.ds(off, tm)] = jnp.where(better, tile_min_d, cur_val)
            idx2_ref[0, 0, :, pl.ds(off, tm)] = jnp.where(better, tile_arg_d, cur_idx)
    else:
        @pl.when(i == 0)
        def _():
            loss_dst_ref[0, 0, :, pl.ds(off, tm)] = tile_min_d

        @pl.when(i > 0)
        def _():
            cur = loss_dst_ref[0, 0, :, pl.ds(off, tm)]
            loss_dst_ref[0, 0, :, pl.ds(off, tm)] = jnp.minimum(cur, tile_min_d)


def chamfer_distance(src, dst, src_weight=1.0, dst_weight=1.0,
                     criterion_mode='l2', reduction='mean',
                     compute_indices=True, tn=256, tm=512, n_splits=None):
    """Pallas port of pcdet's chamfer_distance.

    src: [B, N, C], dst: [B, M, C]. Returns (loss_src, loss_dst, indices1, indices2);
    indices are int32 (None if compute_indices=False).
    """
    assert criterion_mode in ('smooth_l1', 'l1', 'l2')

    B, N, C = src.shape
    Bd, M, Cd = dst.shape
    assert B == Bd and C == Cd

    src = src.astype(jnp.float32)
    dst = dst.astype(jnp.float32)

    if n_splits is None:
        # use the second TensorCore (v7x) when batch alone can't fill the parallel axis
        n_splits = 2 if (B == 1 and N > tn) else 1

    # shrink tiles for small inputs (less padding); keep (8, 128) alignment
    tn = max(8, min(tn, _round_up(pl.cdiv(N, n_splits), 8)))
    tm = max(128, min(tm, _round_up(M, 128)))
    assert tn % 8 == 0 and tm % 128 == 0

    n_tiles_per_split = pl.cdiv(N, n_splits * tn)
    n_pad = n_splits * n_tiles_per_split * tn
    m_tiles = pl.cdiv(M, tm)
    m_pad = m_tiles * tm

    if n_pad != N:
        src = jnp.pad(src, ((0, 0), (0, n_pad - N), (0, 0)),
                      constant_values=_PAD_SENTINEL)
    if m_pad != M:
        dst = jnp.pad(dst, ((0, 0), (0, m_pad - M), (0, 0)),
                      constant_values=_PAD_SENTINEL)

    dst_t = jnp.transpose(dst, (0, 2, 1))                  # [B, C, m_pad] — lane-dense
    dsq = jnp.sum(dst * dst, axis=-1)[:, None, :]          # [B, 1, m_pad]  (||d||^2)

    kernel = functools.partial(
        _chamfer_kernel, mode=criterion_mode, tn=tn, tm=tm,
        n_tiles_per_split=n_tiles_per_split, compute_indices=compute_indices)

    src_idx_map = lambda b, s, i, j: (b, s * n_tiles_per_split + i, 0)

    out_shape = [jax.ShapeDtypeStruct((B, n_pad, 1), jnp.float32)]     # src->dst min
    out_specs = [pl.BlockSpec((1, tn, 1), src_idx_map)]
    if compute_indices:
        out_shape.append(jax.ShapeDtypeStruct((B, n_pad, 1), jnp.int32))
        out_specs.append(pl.BlockSpec((1, tn, 1), src_idx_map))
    out_shape.append(jax.ShapeDtypeStruct((B, n_splits, 1, m_pad), jnp.float32))
    out_specs.append(pl.BlockSpec((1, 1, 1, m_pad), lambda b, s, i, j: (b, s, 0, 0)))
    if compute_indices:
        out_shape.append(jax.ShapeDtypeStruct((B, n_splits, 1, m_pad), jnp.int32))
        out_specs.append(pl.BlockSpec((1, 1, 1, m_pad), lambda b, s, i, j: (b, s, 0, 0)))

    scratch_shapes = [pltpu.VMEM((tn, 1), jnp.float32)]                # running src->dst min
    if compute_indices:
        scratch_shapes.append(pltpu.VMEM((tn, 1), jnp.int32))          # running src->dst argmin
    scratch_shapes.append(pltpu.VMEM((tn, 1), jnp.float32))            # ||s||^2 (l2 only)

    # VMEM budget from the real per-step footprint (padded layouts), with headroom.
    n_out = 2 if compute_indices else 1
    est = (2 * (tn * 128 * 4 + 8 * tm * 4 + 8 * tm * 4)                # double-buffered inputs
           + tn * tm * 4 * (5 if compute_indices else 3)               # dist tile + argmin temps
           + 2 * tn * 128 * 4 * n_out                                  # src->dst output blocks
           + 2 * 8 * m_pad * 4 * n_out                                 # resident dst->src outputs
           + tn * 128 * 4 * len(scratch_shapes))                       # scratch
    vmem_limit = int(min(100 * 1024 * 1024, max(32 * 1024 * 1024, 2 * est)))

    grid_spec = pltpu.PrefetchScalarGridSpec(
        num_scalar_prefetch=0,
        grid=(B, n_splits, n_tiles_per_split, m_tiles),
        in_specs=[pl.BlockSpec((1, tn, C), src_idx_map),
                  pl.BlockSpec((1, C, tm), lambda b, s, i, j: (b, 0, j)),
                  pl.BlockSpec((1, 1, tm), lambda b, s, i, j: (b, 0, j))],
        out_specs=tuple(out_specs),
        scratch_shapes=scratch_shapes,
    )

    outs = pl.pallas_call(
        kernel,
        out_shape=tuple(out_shape),
        grid_spec=grid_spec,
        compiler_params=pltpu.CompilerParams(
            dimension_semantics=("parallel", "parallel", "arbitrary", "arbitrary"),
            vmem_limit_bytes=vmem_limit),
    )(src, dst_t, dsq)

    if compute_indices:
        s2d, idx1_p, d2s, idx2_p = outs
    else:
        s2d, d2s = outs
        idx1_p = idx2_p = None

    src2dst = s2d[:, :N, 0]                         # [B, N]
    d2s_vals = d2s[:, :, 0, :M]                     # [B, S, M]
    dst2src = jnp.min(d2s_vals, axis=1)             # [B, M]

    if compute_indices:
        indices1 = idx1_p[:, :N, 0]                 # [B, N]
        idx2_vals = idx2_p[:, :, 0, :M]             # [B, S, M]
        if n_splits > 1:
            # first split achieving the min -> preserves torch.min first-occurrence ties
            pick = jnp.argmax(d2s_vals == dst2src[:, None, :], axis=1)  # [B, M]
            indices2 = jnp.take_along_axis(idx2_vals, pick[:, None, :], axis=1)[:, 0, :]
        else:
            indices2 = idx2_vals[:, 0, :]
    else:
        indices1 = indices2 = None

    loss_src = src2dst * src_weight
    loss_dst = dst2src * dst_weight
    if reduction == 'sum':
        loss_src = jnp.sum(loss_src)
        loss_dst = jnp.sum(loss_dst)
    elif reduction == 'mean':
        loss_src = jnp.mean(loss_src)
        loss_dst = jnp.mean(loss_dst)
    elif reduction == 'none':
        pass
    else:
        raise NotImplementedError
    return loss_src, loss_dst, indices1, indices2


class ChamferDistance:
    """JAX/Pallas equivalent of the PyTorch ChamferDistance module."""

    def __init__(self, mode='l2', reduction='mean',
                 loss_src_weight=1.0, loss_dst_weight=1.0):
        assert mode in ['smooth_l1', 'l1', 'l2']
        assert reduction in ['none', 'sum', 'mean']
        self.mode = mode
        self.reduction = reduction
        self.loss_src_weight = loss_src_weight
        self.loss_dst_weight = loss_dst_weight

    def __call__(self, source, target, src_weight=1.0, dst_weight=1.0,
                 reduction_override=None, return_indices=False, **kwargs):
        assert reduction_override in (None, 'none', 'mean', 'sum')
        reduction = reduction_override if reduction_override else self.reduction
        # skip argmin work entirely when indices aren't requested (training path)
        loss_source, loss_target, indices1, indices2 = chamfer_distance(
            source, target, src_weight, dst_weight, self.mode, reduction,
            compute_indices=return_indices)
        loss_source = loss_source * self.loss_src_weight
        loss_target = loss_target * self.loss_dst_weight
        if return_indices:
            return loss_source, loss_target, indices1, indices2
        return loss_source, loss_target


def _pairwise_reference(src, dst, mode):
    """Pure-JAX brute-force pairwise distances [B, N, M] for validation."""
    diff = src[:, :, None, :] - dst[:, None, :, :]           # [B, N, M, C]
    if mode == 'l2':
        per = diff * diff
    elif mode == 'l1':
        per = jnp.abs(diff)
    else:  # smooth_l1
        ad = jnp.abs(diff)
        per = jnp.where(ad < 1.0, 0.5 * diff * diff, ad - 0.5)
    return per.sum(-1)                                       # [B, N, M]


if __name__ == "__main__":
    key = jax.random.PRNGKey(0)
    k1, k2 = jax.random.split(key)
    # small but non-trivial: exercises tiling, padding (200/300 -> tile multiples),
    # the loss-only fast path, the index path, and the N-split path.
    B, N, M, C = 2, 200, 300, 4
    src = jax.random.normal(k1, (B, N, C), dtype=jnp.float32)
    dst = jax.random.normal(k2, (B, M, C), dtype=jnp.float32)

    for mode in ('l2', 'smooth_l1'):
        dist_ref = _pairwise_reference(src, dst, mode)       # [B, N, M]
        r_s2d = dist_ref.min(2)
        r_d2s = dist_ref.min(1)

        # loss-only fast path (module default: return_indices=False)
        module = ChamferDistance(mode=mode, reduction='mean')
        ls_m, ld_m = module(src, dst)
        jax.block_until_ready((ls_m, ld_m))
        assert jnp.allclose(ls_m, jnp.mean(r_s2d), rtol=1e-3, atol=1e-4), mode
        assert jnp.allclose(ld_m, jnp.mean(r_d2s), rtol=1e-3, atol=1e-4), mode

        # full path with indices, per-point values (reduction='none')
        ls, ld, i1, i2 = chamfer_distance(src, dst, criterion_mode=mode,
                                          reduction='none')
        jax.block_until_ready((ls, ld, i1, i2))
        assert jnp.allclose(ls, r_s2d, rtol=1e-3, atol=1e-4), mode
        assert jnp.allclose(ld, r_d2s, rtol=1e-3, atol=1e-4), mode

        # indices must achieve the minimum distance (robust to near-tie ordering)
        g1 = jnp.take_along_axis(dist_ref, i1[:, :, None], axis=2)[:, :, 0]
        g2 = jnp.take_along_axis(dist_ref, i2[:, None, :], axis=1)[:, 0, :]
        assert jnp.allclose(g1, r_s2d, rtol=1e-3, atol=1e-3), mode
        assert jnp.allclose(g2, r_d2s, rtol=1e-3, atol=1e-3), mode
        assert bool(jnp.all((i1 >= 0) & (i1 < M))), mode
        assert bool(jnp.all((i2 >= 0) & (i2 < N))), mode

    # exercise the N-split (second-TensorCore / v7x) path explicitly with B=1
    src1, dst1 = src[:1], dst[:1]
    dist_ref1 = _pairwise_reference(src1, dst1, 'l2')
    ls, ld, i1, i2 = chamfer_distance(src1, dst1, criterion_mode='l2',
                                      reduction='none', n_splits=2)
    jax.block_until_ready((ls, ld, i1, i2))
    assert jnp.allclose(ls, dist_ref1.min(2), rtol=1e-3, atol=1e-4)
    assert jnp.allclose(ld, dist_ref1.min(1), rtol=1e-3, atol=1e-4)
    g2 = jnp.take_along_axis(dist_ref1, i2[:, None, :], axis=1)[:, 0, :]
    assert jnp.allclose(g2, dist_ref1.min(1), rtol=1e-3, atol=1e-3)
    assert bool(jnp.all((i2 >= 0) & (i2 < N)))

    print("KERNEL_OK")
</pallas_src>

<mosaic_0001>
module attributes {stable_mosaic.version = 11 : i64} {
  func.func @_chamfer_kernel(%arg0: i32, %arg1: i32, %arg2: i32, %arg3: i32, %arg4: memref<1x200x4xf32, #tpu.memory_space<vmem>>, %arg5: memref<1x4x384xf32, #tpu.memory_space<vmem>>, %arg6: memref<1x1x384xf32, #tpu.memory_space<vmem>>, %arg7: memref<1x200x1xf32, #tpu.memory_space<vmem>>, %arg8: memref<1x1x1x384xf32, #tpu.memory_space<vmem>>, %arg9: memref<200x1xf32, #tpu.memory_space<vmem>>, %arg10: memref<200x1xf32, #tpu.memory_space<vmem>>) attributes {dimension_semantics = [#tpu.dimension_semantics<parallel>, #tpu.dimension_semantics<parallel>, #tpu.dimension_semantics<arbitrary>, #tpu.dimension_semantics<arbitrary>], iteration_bounds = array<i64: 2, 1, 1, 1>, scalar_prefetch = 0 : i64, scratch_operands = 2 : i64, tpu.core_type = #tpu.core_type<tc>, window_params = [{transform_indices = @transform_0, window_bounds = array<i64: 1, 200, 4>}, {transform_indices = @transform_1, window_bounds = array<i64: 1, 4, 384>}, {transform_indices = @transform_2, window_bounds = array<i64: 1, 1, 384>}, {transform_indices = @transform_3, window_bounds = array<i64: 1, 200, 1>}, {transform_indices = @transform_4, window_bounds = array<i64: 1, 1, 1, 384>}]} {
    %c0 = arith.constant 0 : index
    %c0_0 = arith.constant 0 : index
    %c0_1 = arith.constant 0 : index
    %0 = vector.load %arg4[%c0, %c0_0, %c0_1] : memref<1x200x4xf32, #tpu.memory_space<vmem>>, vector<1x200x4xf32>
    %1 = vector.shape_cast %0 : vector<1x200x4xf32> to vector<200x4xf32>
    %c0_2 = arith.constant 0 : index
    %c0_3 = arith.constant 0 : index
    %c0_4 = arith.constant 0 : index
    %2 = vector.load %arg5[%c0_2, %c0_3, %c0_4] : memref<1x4x384xf32, #tpu.memory_space<vmem>>, vector<1x4x384xf32>
    %3 = vector.shape_cast %2 : vector<1x4x384xf32> to vector<4x384xf32>
    %c0_i32 = arith.constant 0 : i32
    %4 = arith.cmpi eq, %arg3, %c0_i32 : i32
    %5 = arith.extui %4 : i1 to i32
    %c0_i32_5 = arith.constant 0 : i32
    %6 = arith.cmpi ne, %5, %c0_i32_5 : i32
    scf.if %6 {
      %40 = arith.mulf %1, %1 : vector<200x4xf32>
      %cst_25 = arith.constant dense<0.000000e+00> : vector<200xf32>
      %41 = vector.multi_reduction <add>, %40, %cst_25 [1] : vector<200x4xf32> to vector<200xf32>
      %42 = vector.shape_cast %41 : vector<200xf32> to vector<200x1xf32>
      %c0_26 = arith.constant 0 : index
      %c0_27 = arith.constant 0 : index
      %43 = vector.load %arg10[%c0_26, %c0_27] : memref<200x1xf32, #tpu.memory_space<vmem>>, vector<200x1xf32>
      tpu.vector_store %arg10[%c0_26, %c0_27], %42 {strides = array<i32>} : memref<200x1xf32, #tpu.memory_space<vmem>>, vector<200x1xf32>,
    } else {
    }
    %cst = arith.constant dense<0.000000e+00> : vector<200x384xf32>
    %7 = tpu.matmul %1, %3, %cst {dimension_numbers = #tpu.dot_dimension_numbers<[1], [0], [0], [1], [0, 0, 1, 1], [], []>} : vector<200x4xf32>, vector<4x384xf32>, vector<200x384xf32> -> vector<200x384xf32>
    %c0_6 = arith.constant 0 : index
    %c0_7 = arith.constant 0 : index
    %8 = vector.load %arg10[%c0_6, %c0_7] : memref<200x1xf32, #tpu.memory_space<vmem>>, vector<200x1xf32>
    %c0_8 = arith.constant 0 : index
    %c0_9 = arith.constant 0 : index
    %c0_10 = arith.constant 0 : index
    %9 = vector.load %arg6[%c0_8, %c0_9, %c0_10] : memref<1x1x384xf32, #tpu.memory_space<vmem>>, vector<1x1x384xf32>
    %10 = vector.shape_cast %9 : vector<1x1x384xf32> to vector<1x384xf32>
    %11 = vector.broadcast %8 : vector<200x1xf32> to vector<200x384xf32>
    %12 = vector.broadcast %10 : vector<1x384xf32> to vector<200x384xf32>
    %13 = arith.addf %11, %12 : vector<200x384xf32>
    %cst_11 = arith.constant 2.000000e+00 : f32
    %14 = vector.broadcast %cst_11 : f32 to vector<200x384xf32>
    %15 = arith.mulf %14, %7 : vector<200x384xf32>
    %16 = arith.subf %13, %15 : vector<200x384xf32>
    %cst_12 = arith.constant 0.000000e+00 : f32
    %17 = vector.broadcast %cst_12 : f32 to vector<200x384xf32>
    %18 = arith.maximumf %16, %17 : vector<200x384xf32>
    %cst_13 = arith.constant dense<0x7F800000> : vector<200xf32>
    %19 = vector.multi_reduction <minimumf>, %18, %cst_13 [1] : vector<200x384xf32> to vector<200xf32>
    %20 = vector.shape_cast %19 : vector<200xf32> to vector<200x1xf32>
    %c0_i32_14 = arith.constant 0 : i32
    %21 = arith.cmpi eq, %arg3, %c0_i32_14 : i32
    %22 = arith.extui %21 : i1 to i32
    %c0_i32_15 = arith.constant 0 : i32
    %23 = arith.cmpi ne, %22, %c0_i32_15 : i32
    scf.if %23 {
      %c0_25 = arith.constant 0 : index
      %c0_26 = arith.constant 0 : index
      %40 = vector.load %arg9[%c0_25, %c0_26] : memref<200x1xf32, #tpu.memory_space<vmem>>, vector<200x1xf32>
      tpu.vector_store %arg9[%c0_25, %c0_26], %20 {strides = array<i32>} : memref<200x1xf32, #tpu.memory_space<vmem>>, vector<200x1xf32>,
    } else {
    }
    %c0_i32_16 = arith.constant 0 : i32
    %24 = arith.cmpi sgt, %arg3, %c0_i32_16 : i32
    %25 = arith.extui %24 : i1 to i32
    %c0_i32_17 = arith.constant 0 : i32
    %26 = arith.cmpi ne, %25, %c0_i32_17 : i32
    scf.if %26 {
      %c0_25 = arith.constant 0 : index
      %c0_26 = arith.constant 0 : index
      %40 = vector.load %arg9[%c0_25, %c0_26] : memref<200x1xf32, #tpu.memory_space<vmem>>, vector<200x1xf32>
      %41 = arith.minimumf %40, %20 : vector<200x1xf32>
      %c0_27 = arith.constant 0 : index
      %c0_28 = arith.constant 0 : index
      %42 = vector.load %arg9[%c0_27, %c0_28] : memref<200x1xf32, #tpu.memory_space<vmem>>, vector<200x1xf32>
      tpu.vector_store %arg9[%c0_27, %c0_28], %41 {strides = array<i32>} : memref<200x1xf32, #tpu.memory_space<vmem>>, vector<200x1xf32>,
    } else {
    }
    %c0_i32_18 = arith.constant 0 : i32
    %27 = arith.cmpi eq, %arg3, %c0_i32_18 : i32
    %28 = arith.extui %27 : i1 to i32
    %c0_i32_19 = arith.constant 0 : i32
    %29 = arith.cmpi ne, %28, %c0_i32_19 : i32
    scf.if %29 {
      %c0_25 = arith.constant 0 : index
      %c0_26 = arith.constant 0 : index
      %40 = vector.load %arg9[%c0_25, %c0_26] : memref<200x1xf32, #tpu.memory_space<vmem>>, vector<200x1xf32>
      %41 = vector.shape_cast %40 : vector<200x1xf32> to vector<1x200x1xf32>
      %c0_27 = arith.constant 0 : index
      %c0_28 = arith.constant 0 : index
      %c0_29 = arith.constant 0 : index
      %42 = vector.load %arg7[%c0_27, %c0_28, %c0_29] : memref<1x200x1xf32, #tpu.memory_space<vmem>>, vector<1x200x1xf32>
      tpu.vector_store %arg7[%c0_27, %c0_28, %c0_29], %41 {strides = array<i32>} : memref<1x200x1xf32, #tpu.memory_space<vmem>>, vector<1x200x1xf32>,
    } else {
    }
    %cst_20 = arith.constant dense<0x7F800000> : vector<384xf32>
    %30 = vector.multi_reduction <minimumf>, %18, %cst_20 [0] : vector<200x384xf32> to vector<384xf32>
    %31 = vector.shape_cast %30 : vector<384xf32> to vector<1x384xf32>
    %c384_i32 = arith.constant 384 : i32
    %32 = arith.muli %arg3, %c384_i32 : i32
    %33 = tpu.assume_multiple %32, 384 : i32
    %c0_i32_21 = arith.constant 0 : i32
    %34 = arith.cmpi eq, %arg2, %c0_i32_21 : i32
    %35 = arith.extui %34 : i1 to i32
    %c0_i32_22 = arith.constant 0 : i32
    %36 = arith.cmpi ne, %35, %c0_i32_22 : i32
    scf.if %36 {
      %c0_25 = arith.constant 0 : index
      %c0_26 = arith.constant 0 : index
      %c0_27 = arith.constant 0 : index
      %40 = arith.index_cast %33 : i32 to index
      %41 = vector.load %arg8[%c0_25, %c0_26, %c0_27, %40] : memref<1x1x1x384xf32, #tpu.memory_space<vmem>>, vector<1x1x1x384xf32>
      %42 = vector.shape_cast %41 : vector<1x1x1x384xf32> to vector<1x384xf32>
      %43 = vector.shape_cast %31 : vector<1x384xf32> to vector<1x1x1x384xf32>
      tpu.vector_store %arg8[%c0_25, %c0_26, %c0_27, %40], %43 {strides = array<i32>} : memref<1x1x1x384xf32, #tpu.memory_space<vmem>>, vector<1x1x1x384xf32>,
    } else {
    }
    %c0_i32_23 = arith.constant 0 : i32
    %37 = arith.cmpi sgt, %arg2, %c0_i32_23 : i32
    %38 = arith.extui %37 : i1 to i32
    %c0_i32_24 = arith.constant 0 : i32
    %39 = arith.cmpi ne, %38, %c0_i32_24 : i32
    scf.if %39 {
      %c0_25 = arith.constant 0 : index
      %c0_26 = arith.constant 0 : index
      %c0_27 = arith.constant 0 : index
      %40 = arith.index_cast %33 : i32 to index
      %41 = vector.load %arg8[%c0_25, %c0_26, %c0_27, %40] : memref<1x1x1x384xf32, #tpu.memory_space<vmem>>, vector<1x1x1x384xf32>
      %42 = vector.shape_cast %41 : vector<1x1x1x384xf32> to vector<1x384xf32>
      %43 = arith.minimumf %42, %31 : vector<1x384xf32>
      %c0_28 = arith.constant 0 : index
      %c0_29 = arith.constant 0 : index
      %c0_30 = arith.constant 0 : index
      %44 = arith.index_cast %33 : i32 to index
      %45 = vector.load %arg8[%c0_28, %c0_29, %c0_30, %44] : memref<1x1x1x384xf32, #tpu.memory_space<vmem>>, vector<1x1x1x384xf32>
      %46 = vector.shape_cast %45 : vector<1x1x1x384xf32> to vector<1x384xf32>
      %47 = vector.shape_cast %43 : vector<1x384xf32> to vector<1x1x1x384xf32>
      tpu.vector_store %arg8[%c0_28, %c0_29, %c0_30, %44], %47 {strides = array<i32>} : memref<1x1x1x384xf32, #tpu.memory_space<vmem>>, vector<1x1x1x384xf32>,
    } else {
    }
    return
  }
  func.func @transform_0(%arg0: i32, %arg1: i32, %arg2: i32, %arg3: i32) -> (i32, i32, i32) {
    %c1_i32 = arith.constant 1 : i32
    %0 = arith.muli %arg1, %c1_i32 : i32
    %1 = arith.addi %0, %arg2 : i32
    %c0_i32 = arith.constant 0 : i32
    %c0_i32_0 = arith.constant 0 : i32
    return %arg0, %1, %c0_i32 : i32, i32, i32
  }
  func.func @transform_1(%arg0: i32, %arg1: i32, %arg2: i32, %arg3: i32) -> (i32, i32, i32) {
    %c0_i32 = arith.constant 0 : i32
    %c0_i32_0 = arith.constant 0 : i32
    return %arg0, %c0_i32, %arg3 : i32, i32, i32
  }
  func.func @transform_2(%arg0: i32, %arg1: i32, %arg2: i32, %arg3: i32) -> (i32, i32, i32) {
    %c0_i32 = arith.constant 0 : i32
    %c0_i32_0 = arith.constant 0 : i32
    return %arg0, %c0_i32, %arg3 : i32, i32, i32
  }
  func.func @transform_3(%arg0: i32, %arg1: i32, %arg2: i32, %arg3: i32) -> (i32, i32, i32) {
    %c1_i32 = arith.constant 1 : i32
    %0 = arith.muli %arg1, %c1_i32 : i32
    %1 = arith.addi %0, %arg2 : i32
    %c0_i32 = arith.constant 0 : i32
    %c0_i32_0 = arith.constant 0 : i32
    return %arg0, %1, %c0_i32 : i32, i32, i32
  }
  func.func @transform_4(%arg0: i32, %arg1: i32, %arg2: i32, %arg3: i32) -> (i32, i32, i32, i32) {
    %c0_i32 = arith.constant 0 : i32
    %c0_i32_0 = arith.constant 0 : i32
    %c0_i32_1 = arith.constant 0 : i32
    return %arg0, %arg1, %c0_i32, %c0_i32_0 : i32, i32, i32, i32
  }
}

</mosaic_0001>

<llo_original>
// kernel: tpu_custom_call.1
$region0: #{tpu_custom_call.1}
  #allocation0 [shape = 'u32[]', space=smem, size = 0x4, offset = 0x4, fixed_abs, tag = 'smem constant byte address 0x4 - core index']
  #allocation1 [shape = 'u32[144,128]{1,0:T(1,128)}', space=vmem, size = 0x12000, scoped, tag = 'internal scratch']
  #allocation2 [shape = 'f32[200,1]{1,0:T(8,128)}', space=vmem, size = 0x19000, scoped, tag = 'scratch operand']
  #allocation3 [shape = 'f32[200,1]{1,0:T(8,128)}', space=vmem, size = 0x19000, scoped, tag = 'scratch operand']
  %s0 = inlined_call_operand.vmem [shape: f32[2,200,4], index: 0, kind: input, shape index: {}]
  %s1 = inlined_call_operand.vmem [shape: f32[2,4,384], index: 1, kind: input, shape index: {}]
  %s2 = inlined_call_operand.vmem [shape: f32[2,1,384], index: 2, kind: input, shape index: {}]
  %s3 = inlined_call_operand.vmem [shape: f32[2,200,1], index: 3, kind: output, shape index: {0}]
  %s4 = inlined_call_operand.hbm [shape: f32[2,1,1,384], index: 4, kind: output, shape index: {1}]
  %5 = xla_tuple %s3, %s4
  %s6 = sld [smem:[#allocation0]]
  $region77: #{tpu_custom_call.1} parent=0
    _
  %s8 = ssub.s32 1, %s6
  %s9 = scalar_select 0, %s8, %s6
  $region1: #{tpu_custom_call.1} parent=0
    #allocation4 [shape = 'u8[3072]{0}', space=vmem, size = 0xc00, scoped, tag = 'output window, operand 1']
    #allocation5 [shape = 's32[2]{0}', space=sflag, size = 0x8, scoped, tag = 'scoped memory for tpu_custom_call.1']
    %10 = vsyncpa [#allocation5], 0
    %s11 = scalar_lea.sflag [#allocation5], 1
    %12 = vsyncpa %s11, 0
    loop: start=0, step=1, limit=4
    $region2: #{tpu_custom_call.1} parent=1 // loop_pre_header
      _
    $region3: #{tpu_custom_call.1} parent=1 // loop_header
      %s14 = sphi 0, %s18
      %p15 = scmp.ge.s32.totalorder %s14, 4
      %s21 = sphi 0, %s47
      %s22 = sphi 0, %s43
      %s23 = sphi 0, %s39
      %s24 = sphi 0, %s35
      %s25 = sphi 0, %s21
      %s26 = sphi 0, %s22
      %s27 = sphi 0, %s23
      %s28 = sphi 0, %s24
      %s29 = sphi 0, %s25
      %s30 = sphi 0, %s26
      %s31 = sphi 0, %s27
      %s32 = sphi 0, %s28
      %s54 = sphi 0, %s56
      %s57 = sphi 0, %s54
      %s58 = sphi 0, %s57
      %s74 = sphi 0, %s58
      %s82 = sphi 0, %s84
      %s85 = sphi 0, %s82
      %s86 = sphi 0, %s85
      %s102 = sphi 0, %s86
      %s110 = sphi 0, %s112
      %s113 = sphi 0, %s110
      %s114 = sphi 0, %s113
      %s130 = sphi 0, %s114
      %s140 = sphi 0, %s142
      %s143 = sphi 0, %s140
      %s144 = sphi 0, %s143
      %s160 = sphi 0, %s144
      %s168 = sphi 0, %s170
      %s171 = sphi 0, %s168
      %s172 = sphi 0, %s171
      %s188 = sphi 0, %s172
    $region4: #{tpu_custom_call.1} parent=1 // loop_header_branch
      %17 = sbr.rel (%p15) target = $region8
    $region5: #{tpu_custom_call.1} parent=1 // loop_body
      %s19 = ssub.s32 %s14, 1
      %s20 = ssub.s32 %s14, 2
      %s33 = sadd.s32 1, %s24
      %p34 = scmp.ge.s32.totalorder %s33, 1
      %s35 = scalar_select %p34, 0, %s33
      %s36 = sadd.s32 1, %s23
      %s37 = scalar_select %p34, %s36, %s23
      %p38 = scmp.ge.s32.totalorder %s37, 1
      %s39 = scalar_select %p38, 0, %s37
      %s40 = sadd.s32 1, %s22
      %s41 = scalar_select %p38, %s40, %s22
      %p42 = scmp.ge.s32.totalorder %s41, 1
      %s43 = scalar_select %p42, 0, %s41
      %s44 = sadd.s32 1, %s21
      %s45 = scalar_select %p42, %s44, %s21
      %p46 = scmp.ge.s32.totalorder %s45, 2
      %s47 = scalar_select %p46, 0, %s45
      %s48 = sadd.s32 %s22, %s23
      %s49 = sadd.s32 %s43, %s39
      %s50 = ssub.s32 %s21, %s47
      %s51 = ssub.s32 %s48, %s49
      %s52 = sor.u32 %s50, %s51
      %p53 = scmp.eq.s32.totalorder %s52, 0
      %s55 = sadd.s32 %s54, 1
      %s56 = scalar_select %p53, %s54, %s55
      %p59 = pneg %p53
      %p60 = scmp.eq.s32.totalorder %s14, 1
      %p61 = por %p59, %p60
      %p62 = scmp.ne.s32.totalorder %s54, %s57
      %p63 = scmp.eq.s32.totalorder %s14, 0
      %p64 = por %p62, %p63
      %p65 = scmp.ne.s32.totalorder %s54, %s57
      %p66 = scmp.eq.s32.totalorder %s19, 1
      %p67 = por %p65, %p66
      %p68 = scmp.ne.s32.totalorder %s57, %s58
      %p69 = scmp.eq.s32.totalorder %s19, 0
      %p70 = por %p68, %p69
      %p71 = scmp.ne.s32.totalorder %s57, %s58
      %p72 = scmp.eq.s32.totalorder %s20, 1
      %p73 = por %p71, %p72
      %p75 = scmp.ne.s32.totalorder %s58, %s74
      %p76 = scmp.eq.s32.totalorder %s20, 0
      %p77 = por %p75, %p76
      %s78 = ssub.s32 %s21, %s47
      %s79 = ssub.s32 %s24, %s35
      %s80 = sor.u32 %s78, %s79
      %p81 = scmp.eq.s32.totalorder %s80, 0
      %s83 = sadd.s32 %s82, 1
      %s84 = scalar_select %p81, %s82, %s83
      %p87 = pneg %p81
      %p88 = scmp.eq.s32.totalorder %s14, 1
      %p89 = por %p87, %p88
      %p90 = scmp.ne.s32.totalorder %s82, %s85
      %p91 = scmp.eq.s32.totalorder %s14, 0
      %p92 = por %p90, %p91
      %p93 = scmp.ne.s32.totalorder %s82, %s85
      %p94 = scmp.eq.s32.totalorder %s19, 1
      %p95 = por %p93, %p94
      %p96 = scmp.ne.s32.totalorder %s85, %s86
      %p97 = scmp.eq.s32.totalorder %s19, 0
      %p98 = por %p96, %p97
      %p99 = scmp.ne.s32.totalorder %s85, %s86
      %p100 = scmp.eq.s32.totalorder %s20, 1
      %p101 = por %p99, %p100
      %p103 = scmp.ne.s32.totalorder %s86, %s102
      %p104 = scmp.eq.s32.totalorder %s20, 0
      %p105 = por %p103, %p104
      %s106 = ssub.s32 %s21, %s47
      %s107 = ssub.s32 %s24, %s35
      %s108 = sor.u32 %s106, %s107
      %p109 = scmp.eq.s32.totalorder %s108, 0
      %s111 = sadd.s32 %s110, 1
      %s112 = scalar_select %p109, %s110, %s111
      %p115 = pneg %p109
      %p116 = scmp.eq.s32.totalorder %s14, 1
      %p117 = por %p115, %p116
      %p118 = scmp.ne.s32.totalorder %s110, %s113
      %p119 = scmp.eq.s32.totalorder %s14, 0
      %p120 = por %p118, %p119
      %p121 = scmp.ne.s32.totalorder %s110, %s113
      %p122 = scmp.eq.s32.totalorder %s19, 1
      %p123 = por %p121, %p122
      %p124 = scmp.ne.s32.totalorder %s113, %s114
      %p125 = scmp.eq.s32.totalorder %s19, 0
      %p126 = por %p124, %p125
      %p127 = scmp.ne.s32.totalorder %s113, %s114
      %p128 = scmp.eq.s32.totalorder %s20, 1
      %p129 = por %p127, %p128
      %p131 = scmp.ne.s32.totalorder %s114, %s130
      %p132 = scmp.eq.s32.totalorder %s20, 0
      %p133 = por %p131, %p132
      %s134 = sadd.s32 %s22, %s23
      %s135 = sadd.s32 %s43, %s39
      %s136 = ssub.s32 %s21, %s47
      %s137 = ssub.s32 %s134, %s135
      %s138 = sor.u32 %s136, %s137
      %p139 = scmp.eq.s32.totalorder %s138, 0
      %s141 = sadd.s32 %s140, 1
      %s142 = scalar_select %p139, %s140, %s141
      %p145 = pneg %p139
      %p146 = scmp.eq.s32.totalorder %s14, 1
      %p147 = por %p145, %p146
      %p148 = scmp.ne.s32.totalorder %s140, %s143
      %p149 = scmp.eq.s32.totalorder %s14, 0
      %p150 = por %p148, %p149
      %p151 = scmp.ne.s32.totalorder %s140, %s143
      %p152 = scmp.eq.s32.totalorder %s19, 1
      %p153 = por %p151, %p152
      %p154 = scmp.ne.s32.totalorder %s143, %s144
      %p155 = scmp.eq.s32.totalorder %s19, 0
      %p156 = por %p154, %p155
      %p157 = scmp.ne.s32.totalorder %s143, %s144
      %p158 = scmp.eq.s32.totalorder %s20, 1
      %p159 = por %p157, %p158
      %p161 = scmp.ne.s32.totalorder %s144, %s160
      %p162 = scmp.eq.s32.totalorder %s20, 0
      %p163 = por %p161, %p162
      %s164 = ssub.s32 %s21, %s47
      %s165 = ssub.s32 %s22, %s43
      %s166 = sor.u32 %s164, %s165
      %p167 = scmp.eq.s32.totalorder %s166, 0
      %s169 = sadd.s32 %s168, 1
      %s170 = scalar_select %p167, %s168, %s169
      %p173 = pneg %p167
      %p174 = scmp.eq.s32.totalorder %s14, 1
      %p175 = por %p173, %p174
      %p176 = scmp.ne.s32.totalorder %s168, %s171
      %p177 = scmp.eq.s32.totalorder %s14, 0
      %p178 = por %p176, %p177
      %p179 = scmp.ne.s32.totalorder %s168, %s171
      %p180 = scmp.eq.s32.totalorder %s19, 1
      %p181 = por %p179, %p180
      %p182 = scmp.ne.s32.totalorder %s171, %s172
      %p183 = scmp.eq.s32.totalorder %s19, 0
      %p184 = por %p182, %p183
      %p185 = scmp.ne.s32.totalorder %s171, %s172
      %p186 = scmp.eq.s32.totalorder %s20, 1
      %p187 = por %p185, %p186
      %p189 = scmp.ne.s32.totalorder %s172, %s188
      %p190 = scmp.eq.s32.totalorder %s20, 0
      %p191 = por %p189, %p190
      %p192 = scmp.le.s32.totalorder 1, %s14
      %p193 = scmp.lt.s32.totalorder %s14, 3
      %p194 = pnand %p192, %p193
      %p195 = pneg %p194
      // Predicated region
      $region9: #{tpu_custom_call.1} parent=5 // pred_check
        _
      $region10: #{tpu_custom_call.1} parent=5 // pred_check_branch
        %197 = sbr.rel (%p194) target = $region12
      $region11: #{tpu_custom_call.1} parent=5 // pred_region
        %s198 = ssub.s32 %s14, 1
      $region12: #{tpu_custom_call.1} parent=5 // pred_fallthru
        _
      %p199 = scmp.lt.s32.totalorder %s14, 2
      // Predicated region
      $region13: #{tpu_custom_call.1} parent=5 // pred_check
        %p200 = pneg %p199
      $region14: #{tpu_custom_call.1} parent=5 // pred_check_branch
        %202 = sbr.rel (%p200) target = $region16
      $region15: #{tpu_custom_call.1} parent=5 // pred_region
        // Predicated region
        $region17: #{tpu_custom_call.1} parent=15 // pred_check
          %p203 = pneg %p64
        $region18: #{tpu_custom_call.1} parent=15 // pred_check_branch
          %205 = sbr.rel (%p203) target = $region20
        $region19: #{tpu_custom_call.1} parent=15 // pred_region
          %s206 = sadd.s32 %s22, %s23
          %s207 = smul.u32 25, %s206
          %p208 = scmp.lt.s32.totalorder %s21, 1
          %s209 = scalar_select %p208, %s21, 1
          %p210 = scmp.lt.s32.totalorder %s207, 24
          %s211 = scalar_select %p210, %s207, 24
          %s212 = smul.addr %s209, 25
          %s213 = sadd.s32 %s211, %s212
          %s214 = smul.addr %s213, 8
          %s215 = scalar_lea.vmem %s0, %s214
          %s216 = sadd.s32 %s22, %s23
          %s217 = smul.u32 25, %s216
        $region20: #{tpu_custom_call.1} parent=15 // pred_fallthru
          _
        // Predicated region
        $region21: #{tpu_custom_call.1} parent=15 // pred_check
          %p218 = pneg %p92
        $region22: #{tpu_custom_call.1} parent=15 // pred_check_branch
          %220 = sbr.rel (%p218) target = $region24
        $region23: #{tpu_custom_call.1} parent=15 // pred_region
          %s221 = smul.u32 3, %s24
          %p222 = scmp.lt.s32.totalorder %s21, 1
          %s223 = scalar_select %p222, %s21, 1
          %p224 = scmp.lt.s32.totalorder %s221, 2
          %s225 = scalar_select %p224, %s221, 2
          %s226 = smul.addr %s223, 3
          %s227 = sadd.s32 %s225, %s226
          %s228 = smul.addr %s227, 4
          %s229 = scalar_lea.vmem %s1, %s228
          %s230 = smul.u32 3, %s24
        $region24: #{tpu_custom_call.1} parent=15 // pred_fallthru
          _
        // Predicated region
        $region25: #{tpu_custom_call.1} parent=15 // pred_check
          %p231 = pneg %p120
        $region26: #{tpu_custom_call.1} parent=15 // pred_check_branch
          %233 = sbr.rel (%p231) target = $region28
        $region27: #{tpu_custom_call.1} parent=15 // pred_region
          %s234 = smul.u32 3, %s24
          %p235 = scmp.lt.s32.totalorder %s21, 1
          %s236 = scalar_select %p235, %s21, 1
          %p237 = scmp.lt.s32.totalorder %s234, 2
          %s238 = scalar_select %p237, %s234, 2
          %s239 = smul.addr %s236, 3
          %s240 = sadd.s32 %s238, %s239
          %s241 = scalar_lea.vmem %s2, %s240
          %s242 = smul.u32 3, %s24
        $region28: #{tpu_custom_call.1} parent=15 // pred_fallthru
          _
      $region16: #{tpu_custom_call.1} parent=5 // pred_fallthru
        _
      %p243 = scmp.le.s32.totalorder 1, %s14
      %p244 = scmp.lt.s32.totalorder %s14, 3
      %p245 = pnand %p243, %p244
      %p246 = pneg %p245
      // Predicated region
      $region29: #{tpu_custom_call.1} parent=5 // pred_check
        _
      $region30: #{tpu_custom_call.1} parent=5 // pred_check_branch
        %248 = sbr.rel (%p245) target = $region32
      $region31: #{tpu_custom_call.1} parent=5 // pred_region
        %s249 = ssub.s32 %s14, 1
        %s250 = sadd.s32 %s26, %s27
        %s251 = smul.u32 25, %s250
        %p252 = scmp.lt.s32.totalorder %s25, 1
        %s253 = scalar_select %p252, %s25, 1
        %p254 = scmp.lt.s32.totalorder %s251, 24
        %s255 = scalar_select %p254, %s251, 24
        %s256 = smul.addr %s253, 25
        %s257 = sadd.s32 %s255, %s256
        %s258 = smul.addr %s257, 8
        %s259 = scalar_lea.vmem %s0, %s258
        %p260 = pneg %p70
        %p261 = pneg %p67
        %s262 = smul.u32 3, %s28
        %p263 = scmp.lt.s32.totalorder %s25, 1
        %s264 = scalar_select %p263, %s25, 1
        %p265 = scmp.lt.s32.totalorder %s262, 2
        %s266 = scalar_select %p265, %s262, 2
        %s267 = smul.addr %s264, 3
        %s268 = sadd.s32 %s266, %s267
        %s269 = smul.addr %s268, 4
        %s270 = scalar_lea.vmem %s1, %s269
        %p271 = pneg %p98
        %p272 = pneg %p95
        %s273 = smul.u32 3, %s28
        %p274 = scmp.lt.s32.totalorder %s25, 1
        %s275 = scalar_select %p274, %s25, 1
        %p276 = scmp.lt.s32.totalorder %s273, 2
        %s277 = scalar_select %p276, %s273, 2
        %s278 = smul.addr %s275, 3
        %s279 = sadd.s32 %s277, %s278
        %s280 = scalar_lea.vmem %s2, %s279
        %p281 = pneg %p126
        %p282 = pneg %p123
        %p283 = pneg %p156
        %p284 = pneg %p153
        %s285 = sadd.s32 %s26, %s27
        %s286 = smul.u32 25, %s285
        %p287 = scmp.lt.s32.totalorder %s25, 1
        %s288 = scalar_select %p287, %s25, 1
        %p289 = scmp.lt.s32.totalorder %s286, 24
        %s290 = scalar_select %p289, %s286, 24
        %s291 = smul.addr %s288, 25
        %s292 = sadd.s32 %s290, %s291
        %s293 = smul.addr %s292, 8
        %s294 = scalar_lea.vmem %s3, %s293
        %p295 = pneg %p184
        %p296 = pneg %p181
        %s297 = sand.u32 %s171, 1
        %s298 = scalar_lea.sflag [#allocation5], %s297
        %s299 = sand.u32 %s171, 1
        %s300 = smul.addr %s299, 3
        %s301 = scalar_lea.vmem [#allocation4], %s300
        %s302 = sadd.s32 %s26, %s27
        %s303 = smul.u32 25, %s302
        %p304 = scmp.lt.s32.totalorder %s25, 1
        %s305 = scalar_select %p304, %s25, 1
        %p306 = scmp.lt.s32.totalorder %s303, 24
        %s307 = scalar_select %p306, %s303, 24
        %s308 = smul.addr %s305, 25
        %s309 = sadd.s32 %s307, %s308
        %s310 = smul.addr %s309, 8
        %s311 = scalar_lea.vmem %s0, %s310
        %s312 = sadd.s32 %s26, %s27
        %s313 = smul.u32 25, %s312
        %s314 = smul.u32 3, %s28
        %p315 = scmp.lt.s32.totalorder %s25, 1
        %s316 = scalar_select %p315, %s25, 1
        %p317 = scmp.lt.s32.totalorder %s314, 2
        %s318 = scalar_select %p317, %s314, 2
        %s319 = smul.addr %s316, 3
        %s320 = sadd.s32 %s318, %s319
        %s321 = smul.addr %s320, 4
        %s322 = scalar_lea.vmem %s1, %s321
        %s323 = smul.u32 3, %s28
        %s324 = smul.u32 3, %s28
        %p325 = scmp.lt.s32.totalorder %s25, 1
        %s326 = scalar_select %p325, %s25, 1
        %p327 = scmp.lt.s32.totalorder %s324, 2
        %s328 = scalar_select %p327, %s324, 2
        %s329 = smul.addr %s326, 3
        %s330 = sadd.s32 %s328, %s329
        %s331 = scalar_lea.vmem %s2, %s330
        %s332 = smul.u32 3, %s28
        %s333 = sadd.s32 %s26, %s27
        %s334 = smul.u32 25, %s333
        %p335 = scmp.lt.s32.totalorder %s25, 1
        %s336 = scalar_select %p335, %s25, 1
        %p337 = scmp.lt.s32.totalorder %s334, 24
        %s338 = scalar_select %p337, %s334, 24
        %s339 = smul.addr %s336, 25
        %s340 = sadd.s32 %s338, %s339
        %s341 = smul.addr %s340, 8
        %s342 = scalar_lea.vmem %s3, %s341
        %s343 = sadd.s32 %s26, %s27
        %s344 = smul.u32 25, %s343
        %v345 = vld [vmem:[%s311] sm:$0xff]
        %v346 = vld [vmem:[%s311 + $0x8] sm:$0xff]
        %v347 = vld [vmem:[%s311 + $0x10] sm:$0xff]
        %v348 = vld [vmem:[%s311 + $0x18] sm:$0xff]
        %v349 = vld [vmem:[%s311 + $0x20] sm:$0xff]
        %v350 = vld [vmem:[%s311 + $0x28] sm:$0xff]
        %v351 = vld [vmem:[%s311 + $0x30] sm:$0xff]
        %v352 = vld [vmem:[%s311 + $0x38] sm:$0xff]
        %v353 = vld [vmem:[%s311 + $0x40] sm:$0xff]
        %v354 = vld [vmem:[%s311 + $0x48] sm:$0xff]
        %v355 = vld [vmem:[%s311 + $0x50] sm:$0xff]
        %v356 = vld [vmem:[%s311 + $0x58] sm:$0xff]
        %v357 = vld [vmem:[%s311 + $0x60] sm:$0xff]
        %v358 = vld [vmem:[%s311 + $0x68] sm:$0xff]
        %v359 = vld [vmem:[%s311 + $0x70] sm:$0xff]
        %v360 = vld [vmem:[%s311 + $0x78] sm:$0xff]
        %v361 = vld [vmem:[%s311 + $0x80] sm:$0xff]
        %v362 = vld [vmem:[%s311 + $0x88] sm:$0xff]
        %v363 = vld [vmem:[%s311 + $0x90] sm:$0xff]
        %v364 = vld [vmem:[%s311 + $0x98] sm:$0xff]
        %v365 = vld [vmem:[%s311 + $0xa0] sm:$0xff]
        %v366 = vld [vmem:[%s311 + $0xa8] sm:$0xff]
        %v367 = vld [vmem:[%s311 + $0xb0] sm:$0xff]
        %v368 = vld [vmem:[%s311 + $0xb8] sm:$0xff]
        %v369 = vld [vmem:[%s311 + $0xc0] sm:$0xff]
        %v370 = vld [vmem:[%s322] sm:$0xff]
        %v371 = vld [vmem:[%s322 + $0x8] sm:$0xf]
        %p372 = scmp.eq.s32.totalorder %s28, 0
        // Predicated region
        $region33: #{tpu_custom_call.1} parent=31 // pred_check
          %p373 = pneg %p372
        $region34: #{tpu_custom_call.1} parent=31 // pred_check_branch
          %375 = sbr.rel (%p373) target = $region36
        $region35: #{tpu_custom_call.1} parent=31 // pred_region
          %v376 = vmul.f32 %v345, %v345
          %v377 = vmul.f32 %v346, %v346
          %v378 = vmul.f32 %v347, %v347
          %v379 = vmul.f32 %v348, %v348
          %v380 = vmul.f32 %v349, %v349
          %v381 = vmul.f32 %v350, %v350
          %v382 = vmul.f32 %v351, %v351
          %v383 = vmul.f32 %v352, %v352
          %v384 = vmul.f32 %v353, %v353
          %v385 = vmul.f32 %v354, %v354
          %v386 = vmul.f32 %v355, %v355
          %v387 = vmul.f32 %v356, %v356
          %v388 = vmul.f32 %v357, %v357
          %v389 = vmul.f32 %v358, %v358
          %v390 = vmul.f32 %v359, %v359
          %v391 = vmul.f32 %v360, %v360
          %v392 = vmul.f32 %v361, %v361
          %v393 = vmul.f32 %v362, %v362
          %v394 = vmul.f32 %v363, %v363
          %v395 = vmul.f32 %v364, %v364
          %v396 = vmul.f32 %v365, %v365
          %v397 = vmul.f32 %v366, %v366
          %v398 = vmul.f32 %v367, %v367
          %v399 = vmul.f32 %v368, %v368
          %v400 = vmul.f32 %v369, %v369
          %vm401 = vcmask 31744
          %v402 = vsel %vm401, %v376, 0.0
          %403 = vadd.xlane.f32.xlu0 %v402
          %v404 = vpop.xlane.xlu0 %403
          %v405 = vsel %vm401, %v377, 0.0
          %406 = vadd.xlane.f32.xlu0 %v405
          %v407 = vpop.xlane.xlu0 %406
          %v408 = vsel %vm401, %v378, 0.0
          %409 = vadd.xlane.f32.xlu0 %v408
          %v410 = vpop.xlane.xlu0 %409
          %v411 = vsel %vm401, %v379, 0.0
          %412 = vadd.xlane.f32.xlu0 %v411
          %v413 = vpop.xlane.xlu0 %412
          %v414 = vsel %vm401, %v380, 0.0
          %415 = vadd.xlane.f32.xlu0 %v414
          %v416 = vpop.xlane.xlu0 %415
          %v417 = vsel %vm401, %v381, 0.0
          %418 = vadd.xlane.f32.xlu0 %v417
          %v419 = vpop.xlane.xlu0 %418
          %v420 = vsel %vm401, %v382, 0.0
          %421 = vadd.xlane.f32.xlu0 %v420
          %v422 = vpop.xlane.xlu0 %421
          %v423 = vsel %vm401, %v383, 0.0
          %424 = vadd.xlane.f32.xlu0 %v423
          %v425 = vpop.xlane.xlu0 %424
          %v426 = vsel %vm401, %v384, 0.0
          %427 = vadd.xlane.f32.xlu0 %v426
          %v428 = vpop.xlane.xlu0 %427
          %v429 = vsel %vm401, %v385, 0.0
          %430 = vadd.xlane.f32.xlu0 %v429
          %v431 = vpop.xlane.xlu0 %430
          %v432 = vsel %vm401, %v386, 0.0
          %433 = vadd.xlane.f32.xlu0 %v432
          %v434 = vpop.xlane.xlu0 %433
          %v435 = vsel %vm401, %v387, 0.0
          %436 = vadd.xlane.f32.xlu0 %v435
          %v437 = vpop.xlane.xlu0 %436
          %v438 = vsel %vm401, %v388, 0.0
          %439 = vadd.xlane.f32.xlu0 %v438
          %v440 = vpop.xlane.xlu0 %439
          %v441 = vsel %vm401, %v389, 0.0
          %442 = vadd.xlane.f32.xlu0 %v441
          %v443 = vpop.xlane.xlu0 %442
          %v444 = vsel %vm401, %v390, 0.0
          %445 = vadd.xlane.f32.xlu0 %v444
          %v446 = vpop.xlane.xlu0 %445
          %v447 = vsel %vm401, %v391, 0.0
          %448 = vadd.xlane.f32.xlu0 %v447
          %v449 = vpop.xlane.xlu0 %448
          %v450 = vsel %vm401, %v392, 0.0
          %451 = vadd.xlane.f32.xlu0 %v450
          %v452 = vpop.xlane.xlu0 %451
          %v453 = vsel %vm401, %v393, 0.0
          %454 = vadd.xlane.f32.xlu0 %v453
          %v455 = vpop.xlane.xlu0 %454
          %v456 = vsel %vm401, %v394, 0.0
          %457 = vadd.xlane.f32.xlu0 %v456
          %v458 = vpop.xlane.xlu0 %457
          %v459 = vsel %vm401, %v395, 0.0
          %460 = vadd.xlane.f32.xlu0 %v459
          %v461 = vpop.xlane.xlu0 %460
          %v462 = vsel %vm401, %v396, 0.0
          %463 = vadd.xlane.f32.xlu0 %v462
          %v464 = vpop.xlane.xlu0 %463
          %v465 = vsel %vm401, %v397, 0.0
          %466 = vadd.xlane.f32.xlu0 %v465
          %v467 = vpop.xlane.xlu0 %466
          %v468 = vsel %vm401, %v398, 0.0
          %469 = vadd.xlane.f32.xlu0 %v468
          %v470 = vpop.xlane.xlu0 %469
          %v471 = vsel %vm401, %v399, 0.0
          %472 = vadd.xlane.f32.xlu0 %v471
          %v473 = vpop.xlane.xlu0 %472
          %v474 = vsel %vm401, %v400, 0.0
          %475 = vadd.xlane.f32.xlu0 %v474
          %v476 = vpop.xlane.xlu0 %475
          %vm477 = vcmask 7168
          %478 = vst.msk [vmem:[#allocation3] sm:$0xff] %vm477, %v404
          %479 = vst.msk [vmem:[#allocation3 + $0x8] sm:$0xff] %vm477, %v407
          %480 = vst.msk [vmem:[#allocation3 + $0x10] sm:$0xff] %vm477, %v410
          %481 = vst.msk [vmem:[#allocation3 + $0x18] sm:$0xff] %vm477, %v413
          %482 = vst.msk [vmem:[#allocation3 + $0x20] sm:$0xff] %vm477, %v416
          %483 = vst.msk [vmem:[#allocation3 + $0x28] sm:$0xff] %vm477, %v419
          %484 = vst.msk [vmem:[#allocation3 + $0x30] sm:$0xff] %vm477, %v422
          %485 = vst.msk [vmem:[#allocation3 + $0x38] sm:$0xff] %vm477, %v425
          %486 = vst.msk [vmem:[#allocation3 + $0x40] sm:$0xff] %vm477, %v428
          %487 = vst.msk [vmem:[#allocation3 + $0x48] sm:$0xff] %vm477, %v431
          %488 = vst.msk [vmem:[#allocation3 + $0x50] sm:$0xff] %vm477, %v434
          %489 = vst.msk [vmem:[#allocation3 + $0x58] sm:$0xff] %vm477, %v437
          %490 = vst.msk [vmem:[#allocation3 + $0x60] sm:$0xff] %vm477, %v440
          %491 = vst.msk [vmem:[#allocation3 + $0x68] sm:$0xff] %vm477, %v443
          %492 = vst.msk [vmem:[#allocation3 + $0x70] sm:$0xff] %vm477, %v446
          %493 = vst.msk [vmem:[#allocation3 + $0x78] sm:$0xff] %vm477, %v449
          %494 = vst.msk [vmem:[#allocation3 + $0x80] sm:$0xff] %vm477, %v452
          %495 = vst.msk [vmem:[#allocation3 + $0x88] sm:$0xff] %vm477, %v455
          %496 = vst.msk [vmem:[#allocation3 + $0x90] sm:$0xff] %vm477, %v458
          %497 = vst.msk [vmem:[#allocation3 + $0x98] sm:$0xff] %vm477, %v461
          %498 = vst.msk [vmem:[#allocation3 + $0xa0] sm:$0xff] %vm477, %v464
          %499 = vst.msk [vmem:[#allocation3 + $0xa8] sm:$0xff] %vm477, %v467
          %500 = vst.msk [vmem:[#allocation3 + $0xb0] sm:$0xff] %vm477, %v470
          %501 = vst.msk [vmem:[#allocation3 + $0xb8] sm:$0xff] %vm477, %v473
          %502 = vst.msk [vmem:[#allocation3 + $0xc0] sm:$0xff] %vm477, %v476
        $region36: #{tpu_custom_call.1} parent=31 // pred_fallthru
          _
        %v505 = vcombine.high %v370, %v370
        %vm506 = vcmask 31744
        %v508 = vsel %vm506, %v345, 0
        %v511 = vsel %vm506, %v346, 0
        %v514 = vsel %vm506, %v347, 0
        %v517 = vsel %vm506, %v348, 0
        %v520 = vsel %vm506, %v349, 0
        %v523 = vsel %vm506, %v350, 0
        %v526 = vsel %vm506, %v351, 0
        %v529 = vsel %vm506, %v352, 0
        %v532 = vsel %vm506, %v353, 0
        %v535 = vsel %vm506, %v354, 0
        %v538 = vsel %vm506, %v355, 0
        %v541 = vsel %vm506, %v356, 0
        %v544 = vsel %vm506, %v357, 0
        %v547 = vsel %vm506, %v358, 0
        %v550 = vsel %vm506, %v359, 0
        %v553 = vsel %vm506, %v360, 0
        %v556 = vsel %vm506, %v361, 0
        %v559 = vsel %vm506, %v362, 0
        %v562 = vsel %vm506, %v363, 0
        %v565 = vsel %vm506, %v364, 0
        %v568 = vsel %vm506, %v365, 0
        %v571 = vsel %vm506, %v366, 0
        %v574 = vsel %vm506, %v367, 0
        %v577 = vsel %vm506, %v368, 0
        %v580 = vsel %vm506, %v369, 0
        %vm582 = vcmask 1043456
        %v583 = vsel %vm582, %v370, 0
        %v585 = vsel %vm582, %v505, 0
        %v587 = vsel %vm582, %v371, 0
        %589 = vmatprep.subr.mxu0 %v585
        %590 = vmatpush1.msra.mxu0 %v583
        %591 = vmatprep.subr.mxu0 0.0
        %592 = vmatpush1.msra.mxu0 0.0
        %593 = vmatprep.subr.mxu0 0.0
        %594 = vmatpush1.msra.mxu0 0.0
        %595 = vmatprep.subr.mxu0 0.0
        %596 = vmatpush1.msra.mxu0 0.0
        %597 = vmatprep.subr.mxu0 0.0
        %598 = vmatpush1.msra.mxu0 0.0
        %599 = vmatprep.subr.mxu0 0.0
        %600 = vmatpush1.msra.mxu0 0.0
        %601 = vmatprep.subr.mxu0 0.0
        %602 = vmatpush1.msra.mxu0 0.0
        %603 = vmatprep.subr.mxu0 0.0
        %604 = vmatpush1.msra.mxu0 0.0
        %605 = vmatprep.subr.mxu0 0.0
        %606 = vmatpush1.msra.mxu0 0.0
        %607 = vmatprep.subr.mxu0 0.0
        %608 = vmatpush1.msra.mxu0 0.0
        %609 = vmatprep.subr.mxu0 0.0
        %610 = vmatpush1.msra.mxu0 0.0
        %611 = vmatprep.subr.mxu0 0.0
        %612 = vmatpush1.msra.mxu0 0.0
        %613 = vmatprep.subr.mxu0 0.0
        %614 = vmatpush1.msra.mxu0 0.0
        %615 = vmatprep.subr.mxu0 0.0
        %616 = vmatpush1.msra.mxu0 0.0
        %617 = vmatprep.subr.mxu0 0.0
        %618 = vmatpush1.msra.mxu0 0.0
        %619 = vmatprep.subr.mxu0 0.0
        %620 = vmatpush1.msra.mxu0 0.0
        %621 = vmatprep.subr.mxu0 0.0
        %622 = vmatpush1.msra.mxu0 0.0
        %623 = vmatprep.subr.mxu0 0.0
        %624 = vmatpush1.msra.mxu0 0.0
        %625 = vmatprep.subr.mxu0 0.0
        %626 = vmatpush1.msra.mxu0 0.0
        %627 = vmatprep.subr.mxu0 0.0
        %628 = vmatpush1.msra.mxu0 0.0
        %629 = vmatprep.subr.mxu0 0.0
        %630 = vmatpush1.msra.mxu0 0.0
        %631 = vmatprep.subr.mxu0 0.0
        %632 = vmatpush1.msra.mxu0 0.0
        %633 = vmatprep.subr.mxu0 0.0
        %634 = vmatpush1.msra.mxu0 0.0
        %635 = vmatprep.subr.mxu0 0.0
        %636 = vmatpush1.msra.mxu0 0.0
        %637 = vmatprep.subr.mxu0 0.0
        %638 = vmatpush1.msra.mxu0 0.0
        %639 = vmatprep.subr.mxu0 0.0
        %640 = vmatpush1.msra.mxu0 0.0
        %641 = vmatprep.subr.mxu0 0.0
        %642 = vmatpush1.msra.mxu0 0.0
        %643 = vmatprep.subr.mxu0 0.0
        %644 = vmatpush1.msra.mxu0 0.0
        %645 = vmatprep.subr.mxu0 0.0
        %646 = vmatpush1.msra.mxu0 0.0
        %647 = vmatprep.subr.mxu0 0.0
        %648 = vmatpush1.msra.mxu0 0.0
        %649 = vmatprep.subr.mxu0 0.0
        %650 = vmatpush1.msra.mxu0 0.0
        %651 = vmatprep.subr.mxu0 0.0
        %652 = vmatpush1.msra.mxu0 0.0
        %653 = vmatprep.mubr.f32.mxu0 0.0
        %654 = vmatmul.mubr.f32.gmra.mrb[0].mxu0 %v508
        %v655 = vpop.f32.mrb[0].mxu0
        %v656 = vadd.f32 0.0, %v655
        %v657 = vpop.f32.mrb[0].mxu0
        %v658 = vadd.f32 0.0, %v657
        %659 = vmatprep.mubr.f32.mxu0 0.0
        %660 = vmatmul.mubr.f32.gmra.mrb[0].mxu0 %v511
        %v661 = vpop.f32.mrb[0].mxu0
        %v662 = vadd.f32 0.0, %v661
        %v663 = vpop.f32.mrb[0].mxu0
        %v664 = vadd.f32 0.0, %v663
        %665 = vmatprep.mubr.f32.mxu0 0.0
        %666 = vmatmul.mubr.f32.gmra.mrb[0].mxu0 %v514
        %v667 = vpop.f32.mrb[0].mxu0
        %v668 = vadd.f32 0.0, %v667
        %v669 = vpop.f32.mrb[0].mxu0
        %v670 = vadd.f32 0.0, %v669
        %671 = vmatprep.mubr.f32.mxu0 0.0
        %672 = vmatmul.mubr.f32.gmra.mrb[0].mxu0 %v517
        %v673 = vpop.f32.mrb[0].mxu0
        %v674 = vadd.f32 0.0, %v673
        %v675 = vpop.f32.mrb[0].mxu0
        %v676 = vadd.f32 0.0, %v675
        %677 = vmatprep.mubr.f32.mxu0 0.0
        %678 = vmatmul.mubr.f32.gmra.mrb[0].mxu0 %v520
        %v679 = vpop.f32.mrb[0].mxu0
        %v680 = vadd.f32 0.0, %v679
        %v681 = vpop.f32.mrb[0].mxu0
        %v682 = vadd.f32 0.0, %v681
        %683 = vmatprep.mubr.f32.mxu0 0.0
        %684 = vmatmul.mubr.f32.gmra.mrb[0].mxu0 %v523
        %v685 = vpop.f32.mrb[0].mxu0
        %v686 = vadd.f32 0.0, %v685
        %v687 = vpop.f32.mrb[0].mxu0
        %v688 = vadd.f32 0.0, %v687
        %689 = vmatprep.mubr.f32.mxu0 0.0
        %690 = vmatmul.mubr.f32.gmra.mrb[0].mxu0 %v526
        %v691 = vpop.f32.mrb[0].mxu0
        %v692 = vadd.f32 0.0, %v691
        %v693 = vpop.f32.mrb[0].mxu0
        %v694 = vadd.f32 0.0, %v693
        %695 = vmatprep.mubr.f32.mxu0 0.0
        %696 = vmatmul.mubr.f32.gmra.mrb[0].mxu0 %v529
        %v697 = vpop.f32.mrb[0].mxu0
        %v698 = vadd.f32 0.0, %v697
        %v699 = vpop.f32.mrb[0].mxu0
        %v700 = vadd.f32 0.0, %v699
        %701 = vmatprep.mubr.f32.mxu0 0.0
        %702 = vmatmul.mubr.f32.gmra.mrb[0].mxu0 %v532
        %v703 = vpop.f32.mrb[0].mxu0
        %v704 = vadd.f32 0.0, %v703
        %v705 = vpop.f32.mrb[0].mxu0
        %v706 = vadd.f32 0.0, %v705
        %707 = vmatprep.mubr.f32.mxu0 0.0
        %708 = vmatmul.mubr.f32.gmra.mrb[0].mxu0 %v535
        %v709 = vpop.f32.mrb[0].mxu0
        %v710 = vadd.f32 0.0, %v709
        %v711 = vpop.f32.mrb[0].mxu0
        %v712 = vadd.f32 0.0, %v711
        %713 = vmatprep.mubr.f32.mxu0 0.0
        %714 = vmatmul.mubr.f32.gmra.mrb[0].mxu0 %v538
        %v715 = vpop.f32.mrb[0].mxu0
        %v716 = vadd.f32 0.0, %v715
        %v717 = vpop.f32.mrb[0].mxu0
        %v718 = vadd.f32 0.0, %v717
        %719 = vmatprep.mubr.f32.mxu0 0.0
        %720 = vmatmul.mubr.f32.gmra.mrb[0].mxu0 %v541
        %v721 = vpop.f32.mrb[0].mxu0
        %v722 = vadd.f32 0.0, %v721
        %v723 = vpop.f32.mrb[0].mxu0
        %v724 = vadd.f32 0.0, %v723
        %725 = vmatprep.mubr.f32.mxu0 0.0
        %726 = vmatmul.mubr.f32.gmra.mrb[0].mxu0 %v544
        %v727 = vpop.f32.mrb[0].mxu0
        %v728 = vadd.f32 0.0, %v727
        %v729 = vpop.f32.mrb[0].mxu0
        %v730 = vadd.f32 0.0, %v729
        %731 = vmatprep.mubr.f32.mxu0 0.0
        %732 = vmatmul.mubr.f32.gmra.mrb[0].mxu0 %v547
        %v733 = vpop.f32.mrb[0].mxu0
        %v734 = vadd.f32 0.0, %v733
        %v735 = vpop.f32.mrb[0].mxu0
        %v736 = vadd.f32 0.0, %v735
        %737 = vmatprep.mubr.f32.mxu0 0.0
        %738 = vmatmul.mubr.f32.gmra.mrb[0].mxu0 %v550
        %v739 = vpop.f32.mrb[0].mxu0
        %v740 = vadd.f32 0.0, %v739
        %v741 = vpop.f32.mrb[0].mxu0
        %v742 = vadd.f32 0.0, %v741
        %743 = vmatprep.mubr.f32.mxu0 0.0
        %744 = vmatmul.mubr.f32.gmra.mrb[0].mxu0 %v553
        %v745 = vpop.f32.mrb[0].mxu0
        %v746 = vadd.f32 0.0, %v745
        %v747 = vpop.f32.mrb[0].mxu0
        %v748 = vadd.f32 0.0, %v747
        %749 = vmatprep.mubr.f32.mxu0 0.0
        %750 = vmatmul.mubr.f32.gmra.mrb[0].mxu0 %v556
        %v751 = vpop.f32.mrb[0].mxu0
        %v752 = vadd.f32 0.0, %v751
        %v753 = vpop.f32.mrb[0].mxu0
        %v754 = vadd.f32 0.0, %v753
        %755 = vmatprep.mubr.f32.mxu0 0.0
        %756 = vmatmul.mubr.f32.gmra.mrb[0].mxu0 %v559
        %v757 = vpop.f32.mrb[0].mxu0
        %v758 = vadd.f32 0.0, %v757
        %v759 = vpop.f32.mrb[0].mxu0
        %v760 = vadd.f32 0.0, %v759
        %761 = vmatprep.mubr.f32.mxu0 0.0
        %762 = vmatmul.mubr.f32.gmra.mrb[0].mxu0 %v562
        %v763 = vpop.f32.mrb[0].mxu0
        %v764 = vadd.f32 0.0, %v763
        %v765 = vpop.f32.mrb[0].mxu0
        %v766 = vadd.f32 0.0, %v765
        %767 = vmatprep.mubr.f32.mxu0 0.0
        %768 = vmatmul.mubr.f32.gmra.mrb[0].mxu0 %v565
        %v769 = vpop.f32.mrb[0].mxu0
        %v770 = vadd.f32 0.0, %v769
        %v771 = vpop.f32.mrb[0].mxu0
        %v772 = vadd.f32 0.0, %v771
        %773 = vmatprep.mubr.f32.mxu0 0.0
        %774 = vmatmul.mubr.f32.gmra.mrb[0].mxu0 %v568
        %v775 = vpop.f32.mrb[0].mxu0
        %v776 = vadd.f32 0.0, %v775
        %v777 = vpop.f32.mrb[0].mxu0
        %v778 = vadd.f32 0.0, %v777
        %779 = vmatprep.mubr.f32.mxu0 0.0
        %780 = vmatmul.mubr.f32.gmra.mrb[0].mxu0 %v571
        %v781 = vpop.f32.mrb[0].mxu0
        %v782 = vadd.f32 0.0, %v781
        %v783 = vpop.f32.mrb[0].mxu0
        %v784 = vadd.f32 0.0, %v783
        %785 = vmatprep.mubr.f32.mxu0 0.0
        %786 = vmatmul.mubr.f32.gmra.mrb[0].mxu0 %v574
        %v787 = vpop.f32.mrb[0].mxu0
        %v788 = vadd.f32 0.0, %v787
        %v789 = vpop.f32.mrb[0].mxu0
        %v790 = vadd.f32 0.0, %v789
        %791 = vmatprep.mubr.f32.mxu0 0.0
        %792 = vmatmul.mubr.f32.gmra.mrb[0].mxu0 %v577
        %v793 = vpop.f32.mrb[0].mxu0
        %v794 = vadd.f32 0.0, %v793
        %v795 = vpop.f32.mrb[0].mxu0
        %v796 = vadd.f32 0.0, %v795
        %797 = vmatprep.mubr.f32.mxu0 0.0
        %798 = vmatmul.mubr.f32.gmra.mrb[0].mxu0 %v580
        %v799 = vpop.f32.mrb[0].mxu0
        %v800 = vadd.f32 0.0, %v799
        %v801 = vpop.f32.mrb[0].mxu0
        %v802 = vadd.f32 0.0, %v801
        %803 = vdwg.mxu0
        %804 = vmatprep.subr.mxu0 0.0
        %805 = vmatpush1.msra.mxu0 %v587
        %806 = vmatprep.subr.mxu0 0.0
        %807 = vmatpush1.msra.mxu0 0.0
        %808 = vmatprep.subr.mxu0 0.0
        %809 = vmatpush1.msra.mxu0 0.0
        %810 = vmatprep.subr.mxu0 0.0
        %811 = vmatpush1.msra.mxu0 0.0
        %812 = vmatprep.subr.mxu0 0.0
        %813 = vmatpush1.msra.mxu0 0.0
        %814 = vmatprep.subr.mxu0 0.0
        %815 = vmatpush1.msra.mxu0 0.0
        %816 = vmatprep.subr.mxu0 0.0
        %817 = vmatpush1.msra.mxu0 0.0
        %818 = vmatprep.subr.mxu0 0.0
        %819 = vmatpush1.msra.mxu0 0.0
        %820 = vmatprep.subr.mxu0 0.0
        %821 = vmatpush1.msra.mxu0 0.0
        %822 = vmatprep.subr.mxu0 0.0
        %823 = vmatpush1.msra.mxu0 0.0
        %824 = vmatprep.subr.mxu0 0.0
        %825 = vmatpush1.msra.mxu0 0.0
        %826 = vmatprep.subr.mxu0 0.0
        %827 = vmatpush1.msra.mxu0 0.0
        %828 = vmatprep.subr.mxu0 0.0
        %829 = vmatpush1.msra.mxu0 0.0
        %830 = vmatprep.subr.mxu0 0.0
        %831 = vmatpush1.msra.mxu0 0.0
        %832 = vmatprep.subr.mxu0 0.0
        %833 = vmatpush1.msra.mxu0 0.0
        %834 = vmatprep.subr.mxu0 0.0
        %835 = vmatpush1.msra.mxu0 0.0
        %836 = vmatprep.subr.mxu0 0.0
        %837 = vmatpush1.msra.mxu0 0.0
        %838 = vmatprep.subr.mxu0 0.0
        %839 = vmatpush1.msra.mxu0 0.0
        %840 = vmatprep.subr.mxu0 0.0
        %841 = vmatpush1.msra.mxu0 0.0
        %842 = vmatprep.subr.mxu0 0.0
        %843 = vmatpush1.msra.mxu0 0.0
        %844 = vmatprep.subr.mxu0 0.0
        %845 = vmatpush1.msra.mxu0 0.0
        %846 = vmatprep.subr.mxu0 0.0
        %847 = vmatpush1.msra.mxu0 0.0
        %848 = vmatprep.subr.mxu0 0.0
        %849 = vmatpush1.msra.mxu0 0.0
        %850 = vmatprep.subr.mxu0 0.0
        %851 = vmatpush1.msra.mxu0 0.0
        %852 = vmatprep.subr.mxu0 0.0
        %853 = vmatpush1.msra.mxu0 0.0
        %854 = vmatprep.subr.mxu0 0.0
        %855 = vmatpush1.msra.mxu0 0.0
        %856 = vmatprep.subr.mxu0 0.0
        %857 = vmatpush1.msra.mxu0 0.0
        %858 = vmatprep.subr.mxu0 0.0
        %859 = vmatpush1.msra.mxu0 0.0
        %860 = vmatprep.subr.mxu0 0.0
        %861 = vmatpush1.msra.mxu0 0.0
        %862 = vmatprep.subr.mxu0 0.0
        %863 = vmatpush1.msra.mxu0 0.0
        %864 = vmatprep.subr.mxu0 0.0
        %865 = vmatpush1.msra.mxu0 0.0
        %866 = vmatprep.subr.mxu0 0.0
        %867 = vmatpush1.msra.mxu0 0.0
        %868 = vmatprep.mubr.f32.mxu0 0.0
        %869 = vmatmul.mubr.f32.gmra.mrb[0].mxu0 %v508
        %v870 = vpop.f32.mrb[0].mxu0
        %v871 = vadd.f32 0.0, %v870
        %v872 = vpop.f32.mrb[0].mxu0
        %873 = vmatprep.mubr.f32.mxu0 0.0
        %874 = vmatmul.mubr.f32.gmra.mrb[0].mxu0 %v511
        %v875 = vpop.f32.mrb[0].mxu0
        %v876 = vadd.f32 0.0, %v875
        %v877 = vpop.f32.mrb[0].mxu0
        %878 = vmatprep.mubr.f32.mxu0 0.0
        %879 = vmatmul.mubr.f32.gmra.mrb[0].mxu0 %v514
        %v880 = vpop.f32.mrb[0].mxu0
        %v881 = vadd.f32 0.0, %v880
        %v882 = vpop.f32.mrb[0].mxu0
        %883 = vmatprep.mubr.f32.mxu0 0.0
        %884 = vmatmul.mubr.f32.gmra.mrb[0].mxu0 %v517
        %v885 = vpop.f32.mrb[0].mxu0
        %v886 = vadd.f32 0.0, %v885
        %v887 = vpop.f32.mrb[0].mxu0
        %888 = vmatprep.mubr.f32.mxu0 0.0
        %889 = vmatmul.mubr.f32.gmra.mrb[0].mxu0 %v520
        %v890 = vpop.f32.mrb[0].mxu0
        %v891 = vadd.f32 0.0, %v890
        %v892 = vpop.f32.mrb[0].mxu0
        %893 = vmatprep.mubr.f32.mxu0 0.0
        %894 = vmatmul.mubr.f32.gmra.mrb[0].mxu0 %v523
        %v895 = vpop.f32.mrb[0].mxu0
        %v896 = vadd.f32 0.0, %v895
        %v897 = vpop.f32.mrb[0].mxu0
        %898 = vmatprep.mubr.f32.mxu0 0.0
        %899 = vmatmul.mubr.f32.gmra.mrb[0].mxu0 %v526
        %v900 = vpop.f32.mrb[0].mxu0
        %v901 = vadd.f32 0.0, %v900
        %v902 = vpop.f32.mrb[0].mxu0
        %903 = vmatprep.mubr.f32.mxu0 0.0
        %904 = vmatmul.mubr.f32.gmra.mrb[0].mxu0 %v529
        %v905 = vpop.f32.mrb[0].mxu0
        %v906 = vadd.f32 0.0, %v905
        %v907 = vpop.f32.mrb[0].mxu0
        %908 = vmatprep.mubr.f32.mxu0 0.0
        %909 = vmatmul.mubr.f32.gmra.mrb[0].mxu0 %v532
        %v910 = vpop.f32.mrb[0].mxu0
        %v911 = vadd.f32 0.0, %v910
        %v912 = vpop.f32.mrb[0].mxu0
        %913 = vmatprep.mubr.f32.mxu0 0.0
        %914 = vmatmul.mubr.f32.gmra.mrb[0].mxu0 %v535
        %v915 = vpop.f32.mrb[0].mxu0
        %v916 = vadd.f32 0.0, %v915
        %v917 = vpop.f32.mrb[0].mxu0
        %918 = vmatprep.mubr.f32.mxu0 0.0
        %919 = vmatmul.mubr.f32.gmra.mrb[0].mxu0 %v538
        %v920 = vpop.f32.mrb[0].mxu0
        %v921 = vadd.f32 0.0, %v920
        %v922 = vpop.f32.mrb[0].mxu0
        %923 = vmatprep.mubr.f32.mxu0 0.0
        %924 = vmatmul.mubr.f32.gmra.mrb[0].mxu0 %v541
        %v925 = vpop.f32.mrb[0].mxu0
        %v926 = vadd.f32 0.0, %v925
        %v927 = vpop.f32.mrb[0].mxu0
        %928 = vmatprep.mubr.f32.mxu0 0.0
        %929 = vmatmul.mubr.f32.gmra.mrb[0].mxu0 %v544
        %v930 = vpop.f32.mrb[0].mxu0
        %v931 = vadd.f32 0.0, %v930
        %v932 = vpop.f32.mrb[0].mxu0
        %933 = vmatprep.mubr.f32.mxu0 0.0
        %934 = vmatmul.mubr.f32.gmra.mrb[0].mxu0 %v547
        %v935 = vpop.f32.mrb[0].mxu0
        %v936 = vadd.f32 0.0, %v935
        %v937 = vpop.f32.mrb[0].mxu0
        %938 = vmatprep.mubr.f32.mxu0 0.0
        %939 = vmatmul.mubr.f32.gmra.mrb[0].mxu0 %v550
        %v940 = vpop.f32.mrb[0].mxu0
        %v941 = vadd.f32 0.0, %v940
        %v942 = vpop.f32.mrb[0].mxu0
        %943 = vmatprep.mubr.f32.mxu0 0.0
        %944 = vmatmul.mubr.f32.gmra.mrb[0].mxu0 %v553
        %v945 = vpop.f32.mrb[0].mxu0
        %v946 = vadd.f32 0.0, %v945
        %v947 = vpop.f32.mrb[0].mxu0
        %948 = vmatprep.mubr.f32.mxu0 0.0
        %949 = vmatmul.mubr.f32.gmra.mrb[0].mxu0 %v556
        %v950 = vpop.f32.mrb[0].mxu0
        %v951 = vadd.f32 0.0, %v950
        %v952 = vpop.f32.mrb[0].mxu0
        %953 = vmatprep.mubr.f32.mxu0 0.0
        %954 = vmatmul.mubr.f32.gmra.mrb[0].mxu0 %v559
        %v955 = vpop.f32.mrb[0].mxu0
        %v956 = vadd.f32 0.0, %v955
        %v957 = vpop.f32.mrb[0].mxu0
        %958 = vmatprep.mubr.f32.mxu0 0.0
        %959 = vmatmul.mubr.f32.gmra.mrb[0].mxu0 %v562
        %v960 = vpop.f32.mrb[0].mxu0
        %v961 = vadd.f32 0.0, %v960
        %v962 = vpop.f32.mrb[0].mxu0
        %963 = vmatprep.mubr.f32.mxu0 0.0
        %964 = vmatmul.mubr.f32.gmra.mrb[0].mxu0 %v565
        %v965 = vpop.f32.mrb[0].mxu0
        %v966 = vadd.f32 0.0, %v965
        %v967 = vpop.f32.mrb[0].mxu0
        %968 = vmatprep.mubr.f32.mxu0 0.0
        %969 = vmatmul.mubr.f32.gmra.mrb[0].mxu0 %v568
        %v970 = vpop.f32.mrb[0].mxu0
        %v971 = vadd.f32 0.0, %v970
        %v972 = vpop.f32.mrb[0].mxu0
        %973 = vmatprep.mubr.f32.mxu0 0.0
        %974 = vmatmul.mubr.f32.gmra.mrb[0].mxu0 %v571
        %v975 = vpop.f32.mrb[0].mxu0
        %v976 = vadd.f32 0.0, %v975
        %v977 = vpop.f32.mrb[0].mxu0
        %978 = vmatprep.mubr.f32.mxu0 0.0
        %979 = vmatmul.mubr.f32.gmra.mrb[0].mxu0 %v574
        %v980 = vpop.f32.mrb[0].mxu0
        %v981 = vadd.f32 0.0, %v980
        %v982 = vpop.f32.mrb[0].mxu0
        %983 = vmatprep.mubr.f32.mxu0 0.0
        %984 = vmatmul.mubr.f32.gmra.mrb[0].mxu0 %v577
        %v985 = vpop.f32.mrb[0].mxu0
        %v986 = vadd.f32 0.0, %v985
        %v987 = vpop.f32.mrb[0].mxu0
        %988 = vmatprep.mubr.f32.mxu0 0.0
        %989 = vmatmul.mubr.f32.gmra.mrb[0].mxu0 %v580
        %v990 = vpop.f32.mrb[0].mxu0
        %v991 = vadd.f32 0.0, %v990
        %v992 = vpop.f32.mrb[0].mxu0
        %993 = vdwg.mxu0
        %v994 = vld [vmem:[#allocation3] sm:$0xff]
        %v995 = vld [vmem:[#allocation3 + $0x8] sm:$0xff]
        %v996 = vld [vmem:[#allocation3 + $0x10] sm:$0xff]
        %v997 = vld [vmem:[#allocation3 + $0x18] sm:$0xff]
        %v998 = vld [vmem:[#allocation3 + $0x20] sm:$0xff]
        %v999 = vld [vmem:[#allocation3 + $0x28] sm:$0xff]
        %v1000 = vld [vmem:[#allocation3 + $0x30] sm:$0xff]
        %v1001 = vld [vmem:[#allocation3 + $0x38] sm:$0xff]
        %v1002 = vld [vmem:[#allocation3 + $0x40] sm:$0xff]
        %v1003 = vld [vmem:[#allocation3 + $0x48] sm:$0xff]
        %v1004 = vld [vmem:[#allocation3 + $0x50] sm:$0xff]
        %v1005 = vld [vmem:[#allocation3 + $0x58] sm:$0xff]
        %v1006 = vld [vmem:[#allocation3 + $0x60] sm:$0xff]
        %v1007 = vld [vmem:[#allocation3 + $0x68] sm:$0xff]
        %v1008 = vld [vmem:[#allocation3 + $0x70] sm:$0xff]
        %v1009 = vld [vmem:[#allocation3 + $0x78] sm:$0xff]
        %v1010 = vld [vmem:[#allocation3 + $0x80] sm:$0xff]
        %v1011 = vld [vmem:[#allocation3 + $0x88] sm:$0xff]
        %v1012 = vld [vmem:[#allocation3 + $0x90] sm:$0xff]
        %v1013 = vld [vmem:[#allocation3 + $0x98] sm:$0xff]
        %v1014 = vld [vmem:[#allocation3 + $0xa0] sm:$0xff]
        %v1015 = vld [vmem:[#allocation3 + $0xa8] sm:$0xff]
        %v1016 = vld [vmem:[#allocation3 + $0xb0] sm:$0xff]
        %v1017 = vld [vmem:[#allocation3 + $0xb8] sm:$0xff]
        %v1018 = vld [vmem:[#allocation3 + $0xc0] sm:$0xff]
        %v1019 = vld [vmem:[%s331] sm:$0x7]
        %1021 = vset.pattern.permute.xlu0 0
        %1022 = vperm.xlu0 %1021, %v994
        %v1023 = vpop.permute.xlu0 %1022
        %1026 = vset.pattern.permute.xlu0 0
        %1027 = vperm.xlu0 %1026, %v995
        %v1028 = vpop.permute.xlu0 %1027
        %1031 = vset.pattern.permute.xlu0 0
        %1032 = vperm.xlu0 %1031, %v996
        %v1033 = vpop.permute.xlu0 %1032
        %1036 = vset.pattern.permute.xlu0 0
        %1037 = vperm.xlu0 %1036, %v997
        %v1038 = vpop.permute.xlu0 %1037
        %1041 = vset.pattern.permute.xlu0 0
        %1042 = vperm.xlu0 %1041, %v998
        %v1043 = vpop.permute.xlu0 %1042
        %1046 = vset.pattern.permute.xlu0 0
        %1047 = vperm.xlu0 %1046, %v999
        %v1048 = vpop.permute.xlu0 %1047
        %1051 = vset.pattern.permute.xlu0 0
        %1052 = vperm.xlu0 %1051, %v1000
        %v1053 = vpop.permute.xlu0 %1052
        %1056 = vset.pattern.permute.xlu0 0
        %1057 = vperm.xlu0 %1056, %v1001
        %v1058 = vpop.permute.xlu0 %1057
        %1061 = vset.pattern.permute.xlu0 0
        %1062 = vperm.xlu0 %1061, %v1002
        %v1063 = vpop.permute.xlu0 %1062
        %1066 = vset.pattern.permute.xlu0 0
        %1067 = vperm.xlu0 %1066, %v1003
        %v1068 = vpop.permute.xlu0 %1067
        %1071 = vset.pattern.permute.xlu0 0
        %1072 = vperm.xlu0 %1071, %v1004
        %v1073 = vpop.permute.xlu0 %1072
        %1076 = vset.pattern.permute.xlu0 0
        %1077 = vperm.xlu0 %1076, %v1005
        %v1078 = vpop.permute.xlu0 %1077
        %1081 = vset.pattern.permute.xlu0 0
        %1082 = vperm.xlu0 %1081, %v1006
        %v1083 = vpop.permute.xlu0 %1082
        %1086 = vset.pattern.permute.xlu0 0
        %1087 = vperm.xlu0 %1086, %v1007
        %v1088 = vpop.permute.xlu0 %1087
        %1091 = vset.pattern.permute.xlu0 0
        %1092 = vperm.xlu0 %1091, %v1008
        %v1093 = vpop.permute.xlu0 %1092
        %1096 = vset.pattern.permute.xlu0 0
        %1097 = vperm.xlu0 %1096, %v1009
        %v1098 = vpop.permute.xlu0 %1097
        %1101 = vset.pattern.permute.xlu0 0
        %1102 = vperm.xlu0 %1101, %v1010
        %v1103 = vpop.permute.xlu0 %1102
        %1106 = vset.pattern.permute.xlu0 0
        %1107 = vperm.xlu0 %1106, %v1011
        %v1108 = vpop.permute.xlu0 %1107
        %1111 = vset.pattern.permute.xlu0 0
        %1112 = vperm.xlu0 %1111, %v1012
        %v1113 = vpop.permute.xlu0 %1112
        %1116 = vset.pattern.permute.xlu0 0
        %1117 = vperm.xlu0 %1116, %v1013
        %v1118 = vpop.permute.xlu0 %1117
        %1121 = vset.pattern.permute.xlu0 0
        %1122 = vperm.xlu0 %1121, %v1014
        %v1123 = vpop.permute.xlu0 %1122
        %1126 = vset.pattern.permute.xlu0 0
        %1127 = vperm.xlu0 %1126, %v1015
        %v1128 = vpop.permute.xlu0 %1127
        %1131 = vset.pattern.permute.xlu0 0
        %1132 = vperm.xlu0 %1131, %v1016
        %v1133 = vpop.permute.xlu0 %1132
        %1136 = vset.pattern.permute.xlu0 0
        %1137 = vperm.xlu0 %1136, %v1017
        %v1138 = vpop.permute.xlu0 %1137
        %1141 = vset.pattern.permute.xlu0 0
        %1142 = vperm.xlu0 %1141, %v1018
        %v1143 = vpop.permute.xlu0 %1142
        %v1146 = vlaneseq
        %v1147 = vshrl.u32 %v1146, 7
        %v1148 = vsub.s32 0, %v1147
        %v1149 = vrot.slane %v1019, %v1148
        %v1150 = vlaneseq
        %v1151 = vshrl.u32 %v1150, 7
        %v1152 = vsub.s32 1, %v1151
        %v1153 = vrot.slane %v1019, %v1152
        %v1154 = vlaneseq
        %v1155 = vshrl.u32 %v1154, 7
        %v1156 = vsub.s32 2, %v1155
        %v1157 = vrot.slane %v1019, %v1156
        %v1161 = vadd.f32 %v1023, %v1149
        %v1162 = vadd.f32 %v1023, %v1153
        %v1163 = vadd.f32 %v1023, %v1157
        %v1164 = vadd.f32 %v1028, %v1149
        %v1165 = vadd.f32 %v1028, %v1153
        %v1166 = vadd.f32 %v1028, %v1157
        %v1167 = vadd.f32 %v1033, %v1149
        %v1168 = vadd.f32 %v1033, %v1153
        %v1169 = vadd.f32 %v1033, %v1157
        %v1170 = vadd.f32 %v1038, %v1149
        %v1171 = vadd.f32 %v1038, %v1153
        %v1172 = vadd.f32 %v1038, %v1157
        %v1173 = vadd.f32 %v1043, %v1149
        %v1174 = vadd.f32 %v1043, %v1153
        %v1175 = vadd.f32 %v1043, %v1157
        %v1176 = vadd.f32 %v1048, %v1149
        %v1177 = vadd.f32 %v1048, %v1153
        %v1178 = vadd.f32 %v1048, %v1157
        %v1179 = vadd.f32 %v1053, %v1149
        %v1180 = vadd.f32 %v1053, %v1153
        %v1181 = vadd.f32 %v1053, %v1157
        %v1182 = vadd.f32 %v1058, %v1149
        %v1183 = vadd.f32 %v1058, %v1153
        %v1184 = vadd.f32 %v1058, %v1157
        %v1185 = vadd.f32 %v1063, %v1149
        %v1186 = vadd.f32 %v1063, %v1153
        %v1187 = vadd.f32 %v1063, %v1157
        %v1188 = vadd.f32 %v1068, %v1149
        %v1189 = vadd.f32 %v1068, %v1153
        %v1190 = vadd.f32 %v1068, %v1157
        %v1191 = vadd.f32 %v1073, %v1149
        %v1192 = vadd.f32 %v1073, %v1153
        %v1193 = vadd.f32 %v1073, %v1157
        %v1194 = vadd.f32 %v1078, %v1149
        %v1195 = vadd.f32 %v1078, %v1153
        %v1196 = vadd.f32 %v1078, %v1157
        %v1197 = vadd.f32 %v1083, %v1149
        %v1198 = vadd.f32 %v1083, %v1153
        %v1199 = vadd.f32 %v1083, %v1157
        %v1200 = vadd.f32 %v1088, %v1149
        %v1201 = vadd.f32 %v1088, %v1153
        %v1202 = vadd.f32 %v1088, %v1157
        %v1203 = vadd.f32 %v1093, %v1149
        %v1204 = vadd.f32 %v1093, %v1153
        %v1205 = vadd.f32 %v1093, %v1157
        %v1206 = vadd.f32 %v1098, %v1149
        %v1207 = vadd.f32 %v1098, %v1153
        %v1208 = vadd.f32 %v1098, %v1157
        %v1209 = vadd.f32 %v1103, %v1149
        %v1210 = vadd.f32 %v1103, %v1153
        %v1211 = vadd.f32 %v1103, %v1157
        %v1212 = vadd.f32 %v1108, %v1149
        %v1213 = vadd.f32 %v1108, %v1153
        %v1214 = vadd.f32 %v1108, %v1157
        %v1215 = vadd.f32 %v1113, %v1149
        %v1216 = vadd.f32 %v1113, %v1153
        %v1217 = vadd.f32 %v1113, %v1157
        %v1218 = vadd.f32 %v1118, %v1149
        %v1219 = vadd.f32 %v1118, %v1153
        %v1220 = vadd.f32 %v1118, %v1157
        %v1221 = vadd.f32 %v1123, %v1149
        %v1222 = vadd.f32 %v1123, %v1153
        %v1223 = vadd.f32 %v1123, %v1157
        %v1224 = vadd.f32 %v1128, %v1149
        %v1225 = vadd.f32 %v1128, %v1153
        %v1226 = vadd.f32 %v1128, %v1157
        %v1227 = vadd.f32 %v1133, %v1149
        %v1228 = vadd.f32 %v1133, %v1153
        %v1229 = vadd.f32 %v1133, %v1157
        %v1230 = vadd.f32 %v1138, %v1149
        %v1231 = vadd.f32 %v1138, %v1153
        %v1232 = vadd.f32 %v1138, %v1157
        %v1233 = vadd.f32 %v1143, %v1149
        %v1234 = vadd.f32 %v1143, %v1153
        %v1235 = vadd.f32 %v1143, %v1157
        %v1236 = vmul.f32 %v656, 2.0
        %v1237 = vmul.f32 %v658, 2.0
        %v1238 = vmul.f32 %v871, 2.0
        %v1239 = vmul.f32 %v662, 2.0
        %v1240 = vmul.f32 %v664, 2.0
        %v1241 = vmul.f32 %v876, 2.0
        %v1242 = vmul.f32 %v668, 2.0
        %v1243 = vmul.f32 %v670, 2.0
        %v1244 = vmul.f32 %v881, 2.0
        %v1245 = vmul.f32 %v674, 2.0
        %v1246 = vmul.f32 %v676, 2.0
        %v1247 = vmul.f32 %v886, 2.0
        %v1248 = vmul.f32 %v680, 2.0
        %v1249 = vmul.f32 %v682, 2.0
        %v1250 = vmul.f32 %v891, 2.0
        %v1251 = vmul.f32 %v686, 2.0
        %v1252 = vmul.f32 %v688, 2.0
        %v1253 = vmul.f32 %v896, 2.0
        %v1254 = vmul.f32 %v692, 2.0
        %v1255 = vmul.f32 %v694, 2.0
        %v1256 = vmul.f32 %v901, 2.0
        %v1257 = vmul.f32 %v698, 2.0
        %v1258 = vmul.f32 %v700, 2.0
        %v1259 = vmul.f32 %v906, 2.0
        %v1260 = vmul.f32 %v704, 2.0
        %v1261 = vmul.f32 %v706, 2.0
        %v1262 = vmul.f32 %v911, 2.0
        %v1263 = vmul.f32 %v710, 2.0
        %v1264 = vmul.f32 %v712, 2.0
        %v1265 = vmul.f32 %v916, 2.0
        %v1266 = vmul.f32 %v716, 2.0
        %v1267 = vmul.f32 %v718, 2.0
        %v1268 = vmul.f32 %v921, 2.0
        %v1269 = vmul.f32 %v722, 2.0
        %v1270 = vmul.f32 %v724, 2.0
        %v1271 = vmul.f32 %v926, 2.0
        %v1272 = vmul.f32 %v728, 2.0
        %v1273 = vmul.f32 %v730, 2.0
        %v1274 = vmul.f32 %v931, 2.0
        %v1275 = vmul.f32 %v734, 2.0
        %v1276 = vmul.f32 %v736, 2.0
        %v1277 = vmul.f32 %v936, 2.0
        %v1278 = vmul.f32 %v740, 2.0
        %v1279 = vmul.f32 %v742, 2.0
        %v1280 = vmul.f32 %v941, 2.0
        %v1281 = vmul.f32 %v746, 2.0
        %v1282 = vmul.f32 %v748, 2.0
        %v1283 = vmul.f32 %v946, 2.0
        %v1284 = vmul.f32 %v752, 2.0
        %v1285 = vmul.f32 %v754, 2.0
        %v1286 = vmul.f32 %v951, 2.0
        %v1287 = vmul.f32 %v758, 2.0
        %v1288 = vmul.f32 %v760, 2.0
        %v1289 = vmul.f32 %v956, 2.0
        %v1290 = vmul.f32 %v764, 2.0
        %v1291 = vmul.f32 %v766, 2.0
        %v1292 = vmul.f32 %v961, 2.0
        %v1293 = vmul.f32 %v770, 2.0
        %v1294 = vmul.f32 %v772, 2.0
        %v1295 = vmul.f32 %v966, 2.0
        %v1296 = vmul.f32 %v776, 2.0
        %v1297 = vmul.f32 %v778, 2.0
        %v1298 = vmul.f32 %v971, 2.0
        %v1299 = vmul.f32 %v782, 2.0
        %v1300 = vmul.f32 %v784, 2.0
        %v1301 = vmul.f32 %v976, 2.0
        %v1302 = vmul.f32 %v788, 2.0
        %v1303 = vmul.f32 %v790, 2.0
        %v1304 = vmul.f32 %v981, 2.0
        %v1305 = vmul.f32 %v794, 2.0
        %v1306 = vmul.f32 %v796, 2.0
        %v1307 = vmul.f32 %v986, 2.0
        %v1308 = vmul.f32 %v800, 2.0
        %v1309 = vmul.f32 %v802, 2.0
        %v1310 = vmul.f32 %v991, 2.0
        %v1311 = vsub.f32 %v1161, %v1236
        %v1312 = vsub.f32 %v1162, %v1237
        %v1313 = vsub.f32 %v1163, %v1238
        %v1314 = vsub.f32 %v1164, %v1239
        %v1315 = vsub.f32 %v1165, %v1240
        %v1316 = vsub.f32 %v1166, %v1241
        %v1317 = vsub.f32 %v1167, %v1242
        %v1318 = vsub.f32 %v1168, %v1243
        %v1319 = vsub.f32 %v1169, %v1244
        %v1320 = vsub.f32 %v1170, %v1245
        %v1321 = vsub.f32 %v1171, %v1246
        %v1322 = vsub.f32 %v1172, %v1247
        %v1323 = vsub.f32 %v1173, %v1248
        %v1324 = vsub.f32 %v1174, %v1249
        %v1325 = vsub.f32 %v1175, %v1250
        %v1326 = vsub.f32 %v1176, %v1251
        %v1327 = vsub.f32 %v1177, %v1252
        %v1328 = vsub.f32 %v1178, %v1253
        %v1329 = vsub.f32 %v1179, %v1254
        %v1330 = vsub.f32 %v1180, %v1255
        %v1331 = vsub.f32 %v1181, %v1256
        %v1332 = vsub.f32 %v1182, %v1257
        %v1333 = vsub.f32 %v1183, %v1258
        %v1334 = vsub.f32 %v1184, %v1259
        %v1335 = vsub.f32 %v1185, %v1260
        %v1336 = vsub.f32 %v1186, %v1261
        %v1337 = vsub.f32 %v1187, %v1262
        %v1338 = vsub.f32 %v1188, %v1263
        %v1339 = vsub.f32 %v1189, %v1264
        %v1340 = vsub.f32 %v1190, %v1265
        %v1341 = vsub.f32 %v1191, %v1266
        %v1342 = vsub.f32 %v1192, %v1267
        %v1343 = vsub.f32 %v1193, %v1268
        %v1344 = vsub.f32 %v1194, %v1269
        %v1345 = vsub.f32 %v1195, %v1270
        %v1346 = vsub.f32 %v1196, %v1271
        %v1347 = vsub.f32 %v1197, %v1272
        %v1348 = vsub.f32 %v1198, %v1273
        %v1349 = vsub.f32 %v1199, %v1274
        %v1350 = vsub.f32 %v1200, %v1275
        %v1351 = vsub.f32 %v1201, %v1276
        %v1352 = vsub.f32 %v1202, %v1277
        %v1353 = vsub.f32 %v1203, %v1278
        %v1354 = vsub.f32 %v1204, %v1279
        %v1355 = vsub.f32 %v1205, %v1280
        %v1356 = vsub.f32 %v1206, %v1281
        %v1357 = vsub.f32 %v1207, %v1282
        %v1358 = vsub.f32 %v1208, %v1283
        %v1359 = vsub.f32 %v1209, %v1284
        %v1360 = vsub.f32 %v1210, %v1285
        %v1361 = vsub.f32 %v1211, %v1286
        %v1362 = vsub.f32 %v1212, %v1287
        %v1363 = vsub.f32 %v1213, %v1288
        %v1364 = vsub.f32 %v1214, %v1289
        %v1365 = vsub.f32 %v1215, %v1290
        %v1366 = vsub.f32 %v1216, %v1291
        %v1367 = vsub.f32 %v1217, %v1292
        %v1368 = vsub.f32 %v1218, %v1293
        %v1369 = vsub.f32 %v1219, %v1294
        %v1370 = vsub.f32 %v1220, %v1295
        %v1371 = vsub.f32 %v1221, %v1296
        %v1372 = vsub.f32 %v1222, %v1297
        %v1373 = vsub.f32 %v1223, %v1298
        %v1374 = vsub.f32 %v1224, %v1299
        %v1375 = vsub.f32 %v1225, %v1300
        %v1376 = vsub.f32 %v1226, %v1301
        %v1377 = vsub.f32 %v1227, %v1302
        %v1378 = vsub.f32 %v1228, %v1303
        %v1379 = vsub.f32 %v1229, %v1304
        %v1380 = vsub.f32 %v1230, %v1305
        %v1381 = vsub.f32 %v1231, %v1306
        %v1382 = vsub.f32 %v1232, %v1307
        %v1383 = vsub.f32 %v1233, %v1308
        %v1384 = vsub.f32 %v1234, %v1309
        %v1385 = vsub.f32 %v1235, %v1310
        %v1386 = vmax.f32 %v1311, 0.0
        %v1387 = vmax.f32 %v1312, 0.0
        %v1388 = vmax.f32 %v1313, 0.0
        %v1389 = vmax.f32 %v1314, 0.0
        %v1390 = vmax.f32 %v1315, 0.0
        %v1391 = vmax.f32 %v1316, 0.0
        %v1392 = vmax.f32 %v1317, 0.0
        %v1393 = vmax.f32 %v1318, 0.0
        %v1394 = vmax.f32 %v1319, 0.0
        %v1395 = vmax.f32 %v1320, 0.0
        %v1396 = vmax.f32 %v1321, 0.0
        %v1397 = vmax.f32 %v1322, 0.0
        %v1398 = vmax.f32 %v1323, 0.0
        %v1399 = vmax.f32 %v1324, 0.0
        %v1400 = vmax.f32 %v1325, 0.0
        %v1401 = vmax.f32 %v1326, 0.0
        %v1402 = vmax.f32 %v1327, 0.0
        %v1403 = vmax.f32 %v1328, 0.0
        %v1404 = vmax.f32 %v1329, 0.0
        %v1405 = vmax.f32 %v1330, 0.0
        %v1406 = vmax.f32 %v1331, 0.0
        %v1407 = vmax.f32 %v1332, 0.0
        %v1408 = vmax.f32 %v1333, 0.0
        %v1409 = vmax.f32 %v1334, 0.0
        %v1410 = vmax.f32 %v1335, 0.0
        %v1411 = vmax.f32 %v1336, 0.0
        %v1412 = vmax.f32 %v1337, 0.0
        %v1413 = vmax.f32 %v1338, 0.0
        %v1414 = vmax.f32 %v1339, 0.0
        %v1415 = vmax.f32 %v1340, 0.0
        %v1416 = vmax.f32 %v1341, 0.0
        %v1417 = vmax.f32 %v1342, 0.0
        %v1418 = vmax.f32 %v1343, 0.0
        %v1419 = vmax.f32 %v1344, 0.0
        %v1420 = vmax.f32 %v1345, 0.0
        %v1421 = vmax.f32 %v1346, 0.0
        %v1422 = vmax.f32 %v1347, 0.0
        %v1423 = vmax.f32 %v1348, 0.0
        %v1424 = vmax.f32 %v1349, 0.0
        %v1425 = vmax.f32 %v1350, 0.0
        %v1426 = vmax.f32 %v1351, 0.0
        %v1427 = vmax.f32 %v1352, 0.0
        %v1428 = vmax.f32 %v1353, 0.0
        %v1429 = vmax.f32 %v1354, 0.0
        %v1430 = vmax.f32 %v1355, 0.0
        %v1431 = vmax.f32 %v1356, 0.0
        %v1432 = vmax.f32 %v1357, 0.0
        %v1433 = vmax.f32 %v1358, 0.0
        %v1434 = vmax.f32 %v1359, 0.0
        %v1435 = vmax.f32 %v1360, 0.0
        %v1436 = vmax.f32 %v1361, 0.0
        %v1437 = vmax.f32 %v1362, 0.0
        %v1438 = vmax.f32 %v1363, 0.0
        %v1439 = vmax.f32 %v1364, 0.0
        %v1440 = vmax.f32 %v1365, 0.0
        %v1441 = vmax.f32 %v1366, 0.0
        %v1442 = vmax.f32 %v1367, 0.0
        %v1443 = vmax.f32 %v1368, 0.0
        %v1444 = vmax.f32 %v1369, 0.0
        %v1445 = vmax.f32 %v1370, 0.0
        %v1446 = vmax.f32 %v1371, 0.0
        %v1447 = vmax.f32 %v1372, 0.0
        %v1448 = vmax.f32 %v1373, 0.0
        %v1449 = vmax.f32 %v1374, 0.0
        %v1450 = vmax.f32 %v1375, 0.0
        %v1451 = vmax.f32 %v1376, 0.0
        %v1452 = vmax.f32 %v1377, 0.0
        %v1453 = vmax.f32 %v1378, 0.0
        %v1454 = vmax.f32 %v1379, 0.0
        %v1455 = vmax.f32 %v1380, 0.0
        %v1456 = vmax.f32 %v1381, 0.0
        %v1457 = vmax.f32 %v1382, 0.0
        %v1458 = vmax.f32 %v1383, 0.0
        %v1459 = vmax.f32 %v1384, 0.0
        %v1460 = vmax.f32 %v1385, 0.0
        %v1461 = vmin.f32 %v1386, %v1387
        %v1462 = vmin.f32 %v1461, %v1388
        %1463 = vmin.xlane.f32.xlu0 %v1462
        %v1464 = vpop.xlane.xlu0 %1463
        %v1465 = vmin.f32 %v1389, %v1390
        %v1466 = vmin.f32 %v1465, %v1391
        %1467 = vmin.xlane.f32.xlu0 %v1466
        %v1468 = vpop.xlane.xlu0 %1467
        %v1469 = vmin.f32 %v1392, %v1393
        %v1470 = vmin.f32 %v1469, %v1394
        %1471 = vmin.xlane.f32.xlu0 %v1470
        %v1472 = vpop.xlane.xlu0 %1471
        %v1473 = vmin.f32 %v1395, %v1396
        %v1474 = vmin.f32 %v1473, %v1397
        %1475 = vmin.xlane.f32.xlu0 %v1474
        %v1476 = vpop.xlane.xlu0 %1475
        %v1477 = vmin.f32 %v1398, %v1399
        %v1478 = vmin.f32 %v1477, %v1400
        %1479 = vmin.xlane.f32.xlu0 %v1478
        %v1480 = vpop.xlane.xlu0 %1479
        %v1481 = vmin.f32 %v1401, %v1402
        %v1482 = vmin.f32 %v1481, %v1403
        %1483 = vmin.xlane.f32.xlu0 %v1482
        %v1484 = vpop.xlane.xlu0 %1483
        %v1485 = vmin.f32 %v1404, %v1405
        %v1486 = vmin.f32 %v1485, %v1406
        %1487 = vmin.xlane.f32.xlu0 %v1486
        %v1488 = vpop.xlane.xlu0 %1487
        %v1489 = vmin.f32 %v1407, %v1408
        %v1490 = vmin.f32 %v1489, %v1409
        %1491 = vmin.xlane.f32.xlu0 %v1490
        %v1492 = vpop.xlane.xlu0 %1491
        %v1493 = vmin.f32 %v1410, %v1411
        %v1494 = vmin.f32 %v1493, %v1412
        %1495 = vmin.xlane.f32.xlu0 %v1494
        %v1496 = vpop.xlane.xlu0 %1495
        %v1497 = vmin.f32 %v1413, %v1414
        %v1498 = vmin.f32 %v1497, %v1415
        %1499 = vmin.xlane.f32.xlu0 %v1498
        %v1500 = vpop.xlane.xlu0 %1499
        %v1501 = vmin.f32 %v1416, %v1417
        %v1502 = vmin.f32 %v1501, %v1418
        %1503 = vmin.xlane.f32.xlu0 %v1502
        %v1504 = vpop.xlane.xlu0 %1503
        %v1505 = vmin.f32 %v1419, %v1420
        %v1506 = vmin.f32 %v1505, %v1421
        %1507 = vmin.xlane.f32.xlu0 %v1506
        %v1508 = vpop.xlane.xlu0 %1507
        %v1509 = vmin.f32 %v1422, %v1423
        %v1510 = vmin.f32 %v1509, %v1424
        %1511 = vmin.xlane.f32.xlu0 %v1510
        %v1512 = vpop.xlane.xlu0 %1511
        %v1513 = vmin.f32 %v1425, %v1426
        %v1514 = vmin.f32 %v1513, %v1427
        %1515 = vmin.xlane.f32.xlu0 %v1514
        %v1516 = vpop.xlane.xlu0 %1515
        %v1517 = vmin.f32 %v1428, %v1429
        %v1518 = vmin.f32 %v1517, %v1430
        %1519 = vmin.xlane.f32.xlu0 %v1518
        %v1520 = vpop.xlane.xlu0 %1519
        %v1521 = vmin.f32 %v1431, %v1432
        %v1522 = vmin.f32 %v1521, %v1433
        %1523 = vmin.xlane.f32.xlu0 %v1522
        %v1524 = vpop.xlane.xlu0 %1523
        %v1525 = vmin.f32 %v1434, %v1435
        %v1526 = vmin.f32 %v1525, %v1436
        %1527 = vmin.xlane.f32.xlu0 %v1526
        %v1528 = vpop.xlane.xlu0 %1527
        %v1529 = vmin.f32 %v1437, %v1438
        %v1530 = vmin.f32 %v1529, %v1439
        %1531 = vmin.xlane.f32.xlu0 %v1530
        %v1532 = vpop.xlane.xlu0 %1531
        %v1533 = vmin.f32 %v1440, %v1441
        %v1534 = vmin.f32 %v1533, %v1442
        %1535 = vmin.xlane.f32.xlu0 %v1534
        %v1536 = vpop.xlane.xlu0 %1535
        %v1537 = vmin.f32 %v1443, %v1444
        %v1538 = vmin.f32 %v1537, %v1445
        %1539 = vmin.xlane.f32.xlu0 %v1538
        %v1540 = vpop.xlane.xlu0 %1539
        %v1541 = vmin.f32 %v1446, %v1447
        %v1542 = vmin.f32 %v1541, %v1448
        %1543 = vmin.xlane.f32.xlu0 %v1542
        %v1544 = vpop.xlane.xlu0 %1543
        %v1545 = vmin.f32 %v1449, %v1450
        %v1546 = vmin.f32 %v1545, %v1451
        %1547 = vmin.xlane.f32.xlu0 %v1546
        %v1548 = vpop.xlane.xlu0 %1547
        %v1549 = vmin.f32 %v1452, %v1453
        %v1550 = vmin.f32 %v1549, %v1454
        %1551 = vmin.xlane.f32.xlu0 %v1550
        %v1552 = vpop.xlane.xlu0 %1551
        %v1553 = vmin.f32 %v1455, %v1456
        %v1554 = vmin.f32 %v1553, %v1457
        %1555 = vmin.xlane.f32.xlu0 %v1554
        %v1556 = vpop.xlane.xlu0 %1555
        %v1557 = vmin.f32 %v1458, %v1459
        %v1558 = vmin.f32 %v1557, %v1460
        %1559 = vmin.xlane.f32.xlu0 %v1558
        %v1560 = vpop.xlane.xlu0 %1559
        // Predicated region
        $region37: #{tpu_custom_call.1} parent=31 // pred_check
          %p1561 = pneg %p372
        $region38: #{tpu_custom_call.1} parent=31 // pred_check_branch
          %1563 = sbr.rel (%p1561) target = $region40
        $region39: #{tpu_custom_call.1} parent=31 // pred_region
          %vm1564 = vcmask 7168
          %1565 = vst.msk [vmem:[#allocation2] sm:$0xff] %vm1564, %v1464
          %1566 = vst.msk [vmem:[#allocation2 + $0x8] sm:$0xff] %vm1564, %v1468
          %1567 = vst.msk [vmem:[#allocation2 + $0x10] sm:$0xff] %vm1564, %v1472
          %1568 = vst.msk [vmem:[#allocation2 + $0x18] sm:$0xff] %vm1564, %v1476
          %1569 = vst.msk [vmem:[#allocation2 + $0x20] sm:$0xff] %vm1564, %v1480
          %1570 = vst.msk [vmem:[#allocation2 + $0x28] sm:$0xff] %vm1564, %v1484
          %1571 = vst.msk [vmem:[#allocation2 + $0x30] sm:$0xff] %vm1564, %v1488
          %1572 = vst.msk [vmem:[#allocation2 + $0x38] sm:$0xff] %vm1564, %v1492
          %1573 = vst.msk [vmem:[#allocation2 + $0x40] sm:$0xff] %vm1564, %v1496
          %1574 = vst.msk [vmem:[#allocation2 + $0x48] sm:$0xff] %vm1564, %v1500
          %1575 = vst.msk [vmem:[#allocation2 + $0x50] sm:$0xff] %vm1564, %v1504
          %1576 = vst.msk [vmem:[#allocation2 + $0x58] sm:$0xff] %vm1564, %v1508
          %1577 = vst.msk [vmem:[#allocation2 + $0x60] sm:$0xff] %vm1564, %v1512
          %1578 = vst.msk [vmem:[#allocation2 + $0x68] sm:$0xff] %vm1564, %v1516
          %1579 = vst.msk [vmem:[#allocation2 + $0x70] sm:$0xff] %vm1564, %v1520
          %1580 = vst.msk [vmem:[#allocation2 + $0x78] sm:$0xff] %vm1564, %v1524
          %1581 = vst.msk [vmem:[#allocation2 + $0x80] sm:$0xff] %vm1564, %v1528
          %1582 = vst.msk [vmem:[#allocation2 + $0x88] sm:$0xff] %vm1564, %v1532
          %1583 = vst.msk [vmem:[#allocation2 + $0x90] sm:$0xff] %vm1564, %v1536
          %1584 = vst.msk [vmem:[#allocation2 + $0x98] sm:$0xff] %vm1564, %v1540
          %1585 = vst.msk [vmem:[#allocation2 + $0xa0] sm:$0xff] %vm1564, %v1544
          %1586 = vst.msk [vmem:[#allocation2 + $0xa8] sm:$0xff] %vm1564, %v1548
          %1587 = vst.msk [vmem:[#allocation2 + $0xb0] sm:$0xff] %vm1564, %v1552
          %1588 = vst.msk [vmem:[#allocation2 + $0xb8] sm:$0xff] %vm1564, %v1556
          %1589 = vst.msk [vmem:[#allocation2 + $0xc0] sm:$0xff] %vm1564, %v1560
        $region40: #{tpu_custom_call.1} parent=31 // pred_fallthru
          _
        %p1590 = scmp.gt.s32.totalorder %s28, 0
        // Predicated region
        $region41: #{tpu_custom_call.1} parent=31 // pred_check
          %p1591 = pneg %p1590
        $region42: #{tpu_custom_call.1} parent=31 // pred_check_branch
          %1593 = sbr.rel (%p1591) target = $region44
        $region43: #{tpu_custom_call.1} parent=31 // pred_region
          %v1594 = vld [vmem:[#allocation2] sm:$0xff]
          %v1595 = vld [vmem:[#allocation2 + $0x8] sm:$0xff]
          %v1596 = vld [vmem:[#allocation2 + $0x10] sm:$0xff]
          %v1597 = vld [vmem:[#allocation2 + $0x18] sm:$0xff]
          %v1598 = vld [vmem:[#allocation2 + $0x20] sm:$0xff]
          %v1599 = vld [vmem:[#allocation2 + $0x28] sm:$0xff]
          %v1600 = vld [vmem:[#allocation2 + $0x30] sm:$0xff]
          %v1601 = vld [vmem:[#allocation2 + $0x38] sm:$0xff]
          %v1602 = vld [vmem:[#allocation2 + $0x40] sm:$0xff]
          %v1603 = vld [vmem:[#allocation2 + $0x48] sm:$0xff]
          %v1604 = vld [vmem:[#allocation2 + $0x50] sm:$0xff]
          %v1605 = vld [vmem:[#allocation2 + $0x58] sm:$0xff]
          %v1606 = vld [vmem:[#allocation2 + $0x60] sm:$0xff]
          %v1607 = vld [vmem:[#allocation2 + $0x68] sm:$0xff]
          %v1608 = vld [vmem:[#allocation2 + $0x70] sm:$0xff]
          %v1609 = vld [vmem:[#allocation2 + $0x78] sm:$0xff]
          %v1610 = vld [vmem:[#allocation2 + $0x80] sm:$0xff]
          %v1611 = vld [vmem:[#allocation2 + $0x88] sm:$0xff]
          %v1612 = vld [vmem:[#allocation2 + $0x90] sm:$0xff]
          %v1613 = vld [vmem:[#allocation2 + $0x98] sm:$0xff]
          %v1614 = vld [vmem:[#allocation2 + $0xa0] sm:$0xff]
          %v1615 = vld [vmem:[#allocation2 + $0xa8] sm:$0xff]
          %v1616 = vld [vmem:[#allocation2 + $0xb0] sm:$0xff]
          %v1617 = vld [vmem:[#allocation2 + $0xb8] sm:$0xff]
          %v1618 = vld [vmem:[#allocation2 + $0xc0] sm:$0xff]
          %v1619 = vmin.f32 %v1594, %v1464
          %v1620 = vmin.f32 %v1595, %v1468
          %v1621 = vmin.f32 %v1596, %v1472
          %v1622 = vmin.f32 %v1597, %v1476
          %v1623 = vmin.f32 %v1598, %v1480
          %v1624 = vmin.f32 %v1599, %v1484
          %v1625 = vmin.f32 %v1600, %v1488
          %v1626 = vmin.f32 %v1601, %v1492
          %v1627 = vmin.f32 %v1602, %v1496
          %v1628 = vmin.f32 %v1603, %v1500
          %v1629 = vmin.f32 %v1604, %v1504
          %v1630 = vmin.f32 %v1605, %v1508
          %v1631 = vmin.f32 %v1606, %v1512
          %v1632 = vmin.f32 %v1607, %v1516
          %v1633 = vmin.f32 %v1608, %v1520
          %v1634 = vmin.f32 %v1609, %v1524
          %v1635 = vmin.f32 %v1610, %v1528
          %v1636 = vmin.f32 %v1611, %v1532
          %v1637 = vmin.f32 %v1612, %v1536
          %v1638 = vmin.f32 %v1613, %v1540
          %v1639 = vmin.f32 %v1614, %v1544
          %v1640 = vmin.f32 %v1615, %v1548
          %v1641 = vmin.f32 %v1616, %v1552
          %v1642 = vmin.f32 %v1617, %v1556
          %v1643 = vmin.f32 %v1618, %v1560
          %vm1644 = vcmask 7168
          %1645 = vst.msk [vmem:[#allocation2] sm:$0xff] %vm1644, %v1619
          %1646 = vst.msk [vmem:[#allocation2 + $0x8] sm:$0xff] %vm1644, %v1620
          %1647 = vst.msk [vmem:[#allocation2 + $0x10] sm:$0xff] %vm1644, %v1621
          %1648 = vst.msk [vmem:[#allocation2 + $0x18] sm:$0xff] %vm1644, %v1622
          %1649 = vst.msk [vmem:[#allocation2 + $0x20] sm:$0xff] %vm1644, %v1623
          %1650 = vst.msk [vmem:[#allocation2 + $0x28] sm:$0xff] %vm1644, %v1624
          %1651 = vst.msk [vmem:[#allocation2 + $0x30] sm:$0xff] %vm1644, %v1625
          %1652 = vst.msk [vmem:[#allocation2 + $0x38] sm:$0xff] %vm1644, %v1626
          %1653 = vst.msk [vmem:[#allocation2 + $0x40] sm:$0xff] %vm1644, %v1627
          %1654 = vst.msk [vmem:[#allocation2 + $0x48] sm:$0xff] %vm1644, %v1628
          %1655 = vst.msk [vmem:[#allocation2 + $0x50] sm:$0xff] %vm1644, %v1629
          %1656 = vst.msk [vmem:[#allocation2 + $0x58] sm:$0xff] %vm1644, %v1630
          %1657 = vst.msk [vmem:[#allocation2 + $0x60] sm:$0xff] %vm1644, %v1631
          %1658 = vst.msk [vmem:[#allocation2 + $0x68] sm:$0xff] %vm1644, %v1632
          %1659 = vst.msk [vmem:[#allocation2 + $0x70] sm:$0xff] %vm1644, %v1633
          %1660 = vst.msk [vmem:[#allocation2 + $0x78] sm:$0xff] %vm1644, %v1634
          %1661 = vst.msk [vmem:[#allocation2 + $0x80] sm:$0xff] %vm1644, %v1635
          %1662 = vst.msk [vmem:[#allocation2 + $0x88] sm:$0xff] %vm1644, %v1636
          %1663 = vst.msk [vmem:[#allocation2 + $0x90] sm:$0xff] %vm1644, %v1637
          %1664 = vst.msk [vmem:[#allocation2 + $0x98] sm:$0xff] %vm1644, %v1638
          %1665 = vst.msk [vmem:[#allocation2 + $0xa0] sm:$0xff] %vm1644, %v1639
          %1666 = vst.msk [vmem:[#allocation2 + $0xa8] sm:$0xff] %vm1644, %v1640
          %1667 = vst.msk [vmem:[#allocation2 + $0xb0] sm:$0xff] %vm1644, %v1641
          %1668 = vst.msk [vmem:[#allocation2 + $0xb8] sm:$0xff] %vm1644, %v1642
          %1669 = vst.msk [vmem:[#allocation2 + $0xc0] sm:$0xff] %vm1644, %v1643
        $region44: #{tpu_custom_call.1} parent=31 // pred_fallthru
          _
        // Predicated region
        $region45: #{tpu_custom_call.1} parent=31 // pred_check
          %p1670 = pneg %p372
        $region46: #{tpu_custom_call.1} parent=31 // pred_check_branch
          %1672 = sbr.rel (%p1670) target = $region48
        $region47: #{tpu_custom_call.1} parent=31 // pred_region
          %v1673 = vld [vmem:[#allocation2] sm:$0xff]
          %v1674 = vld [vmem:[#allocation2 + $0x8] sm:$0xff]
          %v1675 = vld [vmem:[#allocation2 + $0x10] sm:$0xff]
          %v1676 = vld [vmem:[#allocation2 + $0x18] sm:$0xff]
          %v1677 = vld [vmem:[#allocation2 + $0x20] sm:$0xff]
          %v1678 = vld [vmem:[#allocation2 + $0x28] sm:$0xff]
          %v1679 = vld [vmem:[#allocation2 + $0x30] sm:$0xff]
          %v1680 = vld [vmem:[#allocation2 + $0x38] sm:$0xff]
          %v1681 = vld [vmem:[#allocation2 + $0x40] sm:$0xff]
          %v1682 = vld [vmem:[#allocation2 + $0x48] sm:$0xff]
          %v1683 = vld [vmem:[#allocation2 + $0x50] sm:$0xff]
          %v1684 = vld [vmem:[#allocation2 + $0x58] sm:$0xff]
          %v1685 = vld [vmem:[#allocation2 + $0x60] sm:$0xff]
          %v1686 = vld [vmem:[#allocation2 + $0x68] sm:$0xff]
          %v1687 = vld [vmem:[#allocation2 + $0x70] sm:$0xff]
          %v1688 = vld [vmem:[#allocation2 + $0x78] sm:$0xff]
          %v1689 = vld [vmem:[#allocation2 + $0x80] sm:$0xff]
          %v1690 = vld [vmem:[#allocation2 + $0x88] sm:$0xff]
          %v1691 = vld [vmem:[#allocation2 + $0x90] sm:$0xff]
          %v1692 = vld [vmem:[#allocation2 + $0x98] sm:$0xff]
          %v1693 = vld [vmem:[#allocation2 + $0xa0] sm:$0xff]
          %v1694 = vld [vmem:[#allocation2 + $0xa8] sm:$0xff]
          %v1695 = vld [vmem:[#allocation2 + $0xb0] sm:$0xff]
          %v1696 = vld [vmem:[#allocation2 + $0xb8] sm:$0xff]
          %v1697 = vld [vmem:[#allocation2 + $0xc0] sm:$0xff]
          %vm1698 = vcmask 7168
          %1699 = vst.msk [vmem:[%s342] sm:$0xff] %vm1698, %v1673
          %1700 = vst.msk [vmem:[%s342 + $0x8] sm:$0xff] %vm1698, %v1674
          %1701 = vst.msk [vmem:[%s342 + $0x10] sm:$0xff] %vm1698, %v1675
          %1702 = vst.msk [vmem:[%s342 + $0x18] sm:$0xff] %vm1698, %v1676
          %1703 = vst.msk [vmem:[%s342 + $0x20] sm:$0xff] %vm1698, %v1677
          %1704 = vst.msk [vmem:[%s342 + $0x28] sm:$0xff] %vm1698, %v1678
          %1705 = vst.msk [vmem:[%s342 + $0x30] sm:$0xff] %vm1698, %v1679
          %1706 = vst.msk [vmem:[%s342 + $0x38] sm:$0xff] %vm1698, %v1680
          %1707 = vst.msk [vmem:[%s342 + $0x40] sm:$0xff] %vm1698, %v1681
          %1708 = vst.msk [vmem:[%s342 + $0x48] sm:$0xff] %vm1698, %v1682
          %1709 = vst.msk [vmem:[%s342 + $0x50] sm:$0xff] %vm1698, %v1683
          %1710 = vst.msk [vmem:[%s342 + $0x58] sm:$0xff] %vm1698, %v1684
          %1711 = vst.msk [vmem:[%s342 + $0x60] sm:$0xff] %vm1698, %v1685
          %1712 = vst.msk [vmem:[%s342 + $0x68] sm:$0xff] %vm1698, %v1686
          %1713 = vst.msk [vmem:[%s342 + $0x70] sm:$0xff] %vm1698, %v1687
          %1714 = vst.msk [vmem:[%s342 + $0x78] sm:$0xff] %vm1698, %v1688
          %1715 = vst.msk [vmem:[%s342 + $0x80] sm:$0xff] %vm1698, %v1689
          %1716 = vst.msk [vmem:[%s342 + $0x88] sm:$0xff] %vm1698, %v1690
          %1717 = vst.msk [vmem:[%s342 + $0x90] sm:$0xff] %vm1698, %v1691
          %1718 = vst.msk [vmem:[%s342 + $0x98] sm:$0xff] %vm1698, %v1692
          %1719 = vst.msk [vmem:[%s342 + $0xa0] sm:$0xff] %vm1698, %v1693
          %1720 = vst.msk [vmem:[%s342 + $0xa8] sm:$0xff] %vm1698, %v1694
          %1721 = vst.msk [vmem:[%s342 + $0xb0] sm:$0xff] %vm1698, %v1695
          %1722 = vst.msk [vmem:[%s342 + $0xb8] sm:$0xff] %vm1698, %v1696
          %1723 = vst.msk [vmem:[%s342 + $0xc0] sm:$0xff] %vm1698, %v1697
        $region48: #{tpu_custom_call.1} parent=31 // pred_fallthru
          _
        %v1724 = vmin.f32 %v1386, %v1392
        %v1725 = vmin.f32 %v1389, %v1395
        %v1726 = vmin.f32 %v1724, %v1398
        %v1727 = vmin.f32 %v1725, %v1401
        %v1728 = vmin.f32 %v1726, %v1404
        %v1729 = vmin.f32 %v1727, %v1407
        %v1730 = vmin.f32 %v1728, %v1410
        %v1731 = vmin.f32 %v1729, %v1413
        %v1732 = vmin.f32 %v1730, %v1416
        %v1733 = vmin.f32 %v1731, %v1419
        %v1734 = vmin.f32 %v1732, %v1422
        %v1735 = vmin.f32 %v1733, %v1425
        %v1736 = vmin.f32 %v1734, %v1428
        %v1737 = vmin.f32 %v1735, %v1431
        %v1738 = vmin.f32 %v1736, %v1434
        %v1739 = vmin.f32 %v1737, %v1437
        %v1740 = vmin.f32 %v1738, %v1440
        %v1741 = vmin.f32 %v1739, %v1443
        %v1742 = vmin.f32 %v1740, %v1446
        %v1743 = vmin.f32 %v1741, %v1449
        %v1744 = vmin.f32 %v1742, %v1452
        %v1745 = vmin.f32 %v1743, %v1455
        %v1746 = vmin.f32 %v1744, %v1458
        %v1747 = vmin.f32 %v1746, %v1745
        %v1748 = vrot.slane %v1747, 4
        %v1749 = vmin.f32 %v1747, %v1748
        %v1750 = vrot.slane %v1749, 2
        %v1751 = vmin.f32 %v1749, %v1750
        %v1752 = vrot.slane %v1751, 1
        %v1753 = vmin.f32 %v1751, %v1752
        %v1754 = vmin.f32 %v1387, %v1393
        %v1755 = vmin.f32 %v1390, %v1396
        %v1756 = vmin.f32 %v1754, %v1399
        %v1757 = vmin.f32 %v1755, %v1402
        %v1758 = vmin.f32 %v1756, %v1405
        %v1759 = vmin.f32 %v1757, %v1408
        %v1760 = vmin.f32 %v1758, %v1411
        %v1761 = vmin.f32 %v1759, %v1414
        %v1762 = vmin.f32 %v1760, %v1417
        %v1763 = vmin.f32 %v1761, %v1420
        %v1764 = vmin.f32 %v1762, %v1423
        %v1765 = vmin.f32 %v1763, %v1426
        %v1766 = vmin.f32 %v1764, %v1429
        %v1767 = vmin.f32 %v1765, %v1432
        %v1768 = vmin.f32 %v1766, %v1435
        %v1769 = vmin.f32 %v1767, %v1438
        %v1770 = vmin.f32 %v1768, %v1441
        %v1771 = vmin.f32 %v1769, %v1444
        %v1772 = vmin.f32 %v1770, %v1447
        %v1773 = vmin.f32 %v1771, %v1450
        %v1774 = vmin.f32 %v1772, %v1453
        %v1775 = vmin.f32 %v1773, %v1456
        %v1776 = vmin.f32 %v1774, %v1459
        %v1777 = vmin.f32 %v1776, %v1775
        %v1778 = vrot.slane %v1777, 4
        %v1779 = vmin.f32 %v1777, %v1778
        %v1780 = vrot.slane %v1779, 2
        %v1781 = vmin.f32 %v1779, %v1780
        %v1782 = vrot.slane %v1781, 1
        %v1783 = vmin.f32 %v1781, %v1782
        %v1784 = vmin.f32 %v1388, %v1394
        %v1785 = vmin.f32 %v1391, %v1397
        %v1786 = vmin.f32 %v1784, %v1400
        %v1787 = vmin.f32 %v1785, %v1403
        %v1788 = vmin.f32 %v1786, %v1406
        %v1789 = vmin.f32 %v1787, %v1409
        %v1790 = vmin.f32 %v1788, %v1412
        %v1791 = vmin.f32 %v1789, %v1415
        %v1792 = vmin.f32 %v1790, %v1418
        %v1793 = vmin.f32 %v1791, %v1421
        %v1794 = vmin.f32 %v1792, %v1424
        %v1795 = vmin.f32 %v1793, %v1427
        %v1796 = vmin.f32 %v1794, %v1430
        %v1797 = vmin.f32 %v1795, %v1433
        %v1798 = vmin.f32 %v1796, %v1436
        %v1799 = vmin.f32 %v1797, %v1439
        %v1800 = vmin.f32 %v1798, %v1442
        %v1801 = vmin.f32 %v1799, %v1445
        %v1802 = vmin.f32 %v1800, %v1448
        %v1803 = vmin.f32 %v1801, %v1451
        %v1804 = vmin.f32 %v1802, %v1454
        %v1805 = vmin.f32 %v1803, %v1457
        %v1806 = vmin.f32 %v1804, %v1460
        %v1807 = vmin.f32 %v1806, %v1805
        %v1808 = vrot.slane %v1807, 4
        %v1809 = vmin.f32 %v1807, %v1808
        %v1810 = vrot.slane %v1809, 2
        %v1811 = vmin.f32 %v1809, %v1810
        %v1812 = vrot.slane %v1811, 1
        %v1813 = vmin.f32 %v1811, %v1812
        %s1814 = smul.u32 %s28, 384
        %p1815 = scmp.eq.s32.totalorder %s27, 0
        // Predicated region
        $region49: #{tpu_custom_call.1} parent=31 // pred_check
          %p1816 = pneg %p1815
        $region50: #{tpu_custom_call.1} parent=31 // pred_check_branch
          %1818 = sbr.rel (%p1816) target = $region52
        $region51: #{tpu_custom_call.1} parent=31 // pred_region
          %v1822 = vcombine.low %v1753, %v1783
          %v1824 = vunpack.c.l.s4 1966171168
          %v1825 = vunpack.c.0.s8 %v1824
          %v1826 = vlaneseq
          %v1827 = vshrl.u32 %v1826, 7
          %v1828 = vsub.s32 %v1825, %v1827
          %v1829 = vrot.slane %v1822, %v1828
          %v1831 = vunpack.c.l.s4 1966171168
          %v1832 = vunpack.c.0.s8 %v1831
          %v1833 = vlaneseq
          %v1834 = vshrl.u32 %v1833, 7
          %v1835 = vsub.s32 %v1832, %v1834
          %v1836 = vrot.slane %v1813, %v1835
          %v1837 = vcombine.low %v1829, %v1836
          %v1839 = vunpack.c.l.s4 1966171168
          %v1840 = vunpack.c.0.s8 %v1839
          %v1841 = vlaneseq
          %v1842 = vshrl.u32 %v1841, 7
          %v1843 = vsub.s32 %v1840, %v1842
          %v1844 = vrot.slane %v1837, %v1843
          %s1846 = sshra.s32 %s1814, 7
          %s1847 = sand.u32 %s1814, 127
          %s1848 = scalar_lea.vmem %s301, %s1846 [#allocation4]
          %v1849 = vlaneseq
          %vm1850 = vcmp.ge.s32.totalorder %v1849, 0
          %vm1851 = vcmp.lt.s32.totalorder %v1849, 384
          %vm1852 = vmand %vm1850, %vm1851
          %1853 = vst.msk [vmem:[%s1848] sm:$0x7] %vm1852, %v1844
        $region52: #{tpu_custom_call.1} parent=31 // pred_fallthru
          _
        %p1854 = scmp.gt.s32.totalorder %s27, 0
        // Predicated region
        $region53: #{tpu_custom_call.1} parent=31 // pred_check
          %p1855 = pneg %p1854
        $region54: #{tpu_custom_call.1} parent=31 // pred_check_branch
          %1857 = sbr.rel (%p1855) target = $region56
        $region55: #{tpu_custom_call.1} parent=31 // pred_region
          %s1858 = sshra.s32 %s1814, 7
          %s1859 = sand.u32 %s1814, 127
          %s1860 = scalar_lea.vmem %s301, %s1858 [#allocation4]
          %v1861 = vld [vmem:[%s1860] sm:$0x7]
          %v1865 = vcombine.low %v1753, %v1783
          %v1867 = vunpack.c.l.s4 1966171168
          %v1868 = vunpack.c.0.s8 %v1867
          %v1869 = vlaneseq
          %v1870 = vshrl.u32 %v1869, 7
          %v1871 = vsub.s32 %v1868, %v1870
          %v1872 = vrot.slane %v1865, %v1871
          %v1874 = vunpack.c.l.s4 1966171168
          %v1875 = vunpack.c.0.s8 %v1874
          %v1876 = vlaneseq
          %v1877 = vshrl.u32 %v1876, 7
          %v1878 = vsub.s32 %v1875, %v1877
          %v1879 = vrot.slane %v1813, %v1878
          %v1880 = vcombine.low %v1872, %v1879
          %v1882 = vunpack.c.l.s4 1966171168
          %v1883 = vunpack.c.0.s8 %v1882
          %v1884 = vlaneseq
          %v1885 = vshrl.u32 %v1884, 7
          %v1886 = vsub.s32 %v1883, %v1885
          %v1887 = vrot.slane %v1880, %v1886
          %v1889 = vmin.f32 %v1861, %v1887
          %v1890 = vlaneseq
          %vm1891 = vcmp.ge.s32.totalorder %v1890, 0
          %vm1892 = vcmp.lt.s32.totalorder %v1890, 384
          %vm1893 = vmand %vm1891, %vm1892
          %1894 = vst.msk [vmem:[%s1860] sm:$0x7] %vm1893, %v1889
        $region56: #{tpu_custom_call.1} parent=31 // pred_fallthru
          _
        %s1895 = sadd.s32 %s26, %s27
        %s1896 = smul.u32 25, %s1895
        %p1897 = scmp.lt.s32.totalorder %s25, 1
        %s1898 = scalar_select %p1897, %s25, 1
        %p1899 = scmp.lt.s32.totalorder %s1896, 24
        %s1900 = scalar_select %p1899, %s1896, 24
        %s1901 = smul.addr %s1898, 25
        %s1902 = sadd.s32 %s1900, %s1901
        %s1903 = smul.addr %s1902, 8
        %s1904 = scalar_lea.vmem %s3, %s1903
        %s1905 = sand.u32 %s171, 1
        %s1906 = scalar_lea.sflag [#allocation5], %s1905
        %s1907 = sand.u32 %s171, 1
        %s1908 = smul.addr %s1907, 3
        %s1909 = scalar_lea.vmem [#allocation4], %s1908
        // Predicated region
        $region57: #{tpu_custom_call.1} parent=31 // pred_check
          %p1910 = pneg %p153
        $region58: #{tpu_custom_call.1} parent=31 // pred_check_branch
          %1912 = sbr.rel (%p1910) target = $region60
        $region59: #{tpu_custom_call.1} parent=31 // pred_region
          %s1913 = sadd.s32 %s26, %s27
          %s1914 = smul.u32 25, %s1913
        $region60: #{tpu_custom_call.1} parent=31 // pred_fallthru
          _
        // Predicated region
        $region61: #{tpu_custom_call.1} parent=31 // pred_check
          %p1915 = pneg %p181
        $region62: #{tpu_custom_call.1} parent=31 // pred_check_branch
          %1917 = sbr.rel (%p1915) target = $region64
        $region63: #{tpu_custom_call.1} parent=31 // pred_region
          %s1919 = ssub.s32 48, 48
          %1920 = vsyncadd %s1906, %s1919
          %s1921 = smul.addr %s26, 3
          %s1922 = smul.addr %s25, 3
          %s1923 = sadd.s32 %s1921, %s1922
          %s1924 = smul.addr %s1923, 16
          %s1925 = scalar_lea.hbm %s4, %s1924
          %s1927 = sshll.u32 %s1909, 4
          %s1928 = int_to_ptr.vmem [resolvable:$true] %s1927
          %1930 = dma.vmem_to_hbm [thread:$0]  %s1928, 48, %s1925, %s1906
        $region64: #{tpu_custom_call.1} parent=31 // pred_fallthru
          _
      $region32: #{tpu_custom_call.1} parent=5 // pred_fallthru
        _
      %p1931 = scmp.le.s32.totalorder 2, %s14
      // Predicated region
      $region65: #{tpu_custom_call.1} parent=5 // pred_check
        %p1932 = pneg %p1931
      $region66: #{tpu_custom_call.1} parent=5 // pred_check_branch
        %1934 = sbr.rel (%p1932) target = $region68
      $region67: #{tpu_custom_call.1} parent=5 // pred_region
        %s1935 = ssub.s32 %s14, 2
        // Predicated region
        $region69: #{tpu_custom_call.1} parent=67 // pred_check
          %p1936 = pneg %p159
        $region70: #{tpu_custom_call.1} parent=67 // pred_check_branch
          %1938 = sbr.rel (%p1936) target = $region72
        $region71: #{tpu_custom_call.1} parent=67 // pred_region
          %s1939 = sadd.s32 %s30, %s31
          %s1940 = smul.u32 25, %s1939
          %p1941 = scmp.lt.s32.totalorder %s29, 1
          %s1942 = scalar_select %p1941, %s29, 1
          %p1943 = scmp.lt.s32.totalorder %s1940, 24
          %s1944 = scalar_select %p1943, %s1940, 24
          %s1945 = smul.addr %s1942, 25
          %s1946 = sadd.s32 %s1944, %s1945
          %s1947 = smul.addr %s1946, 8
          %s1948 = scalar_lea.vmem %s3, %s1947
        $region72: #{tpu_custom_call.1} parent=67 // pred_fallthru
          _
        // Predicated region
        $region73: #{tpu_custom_call.1} parent=67 // pred_check
          %p1949 = pneg %p187
        $region74: #{tpu_custom_call.1} parent=67 // pred_check_branch
          %1951 = sbr.rel (%p1949) target = $region76
        $region75: #{tpu_custom_call.1} parent=67 // pred_region
          %s1952 = sand.u32 %s172, 1
          %s1953 = scalar_lea.sflag [#allocation5], %s1952
          %s1954 = sand.u32 %s172, 1
          %s1955 = smul.addr %s1954, 3
          %s1956 = scalar_lea.vmem [#allocation4], %s1955
          %1957 = dma.done %s1953, 48
        $region76: #{tpu_custom_call.1} parent=67 // pred_fallthru
          _
      $region68: #{tpu_custom_call.1} parent=5 // pred_fallthru
        _
    $region6: #{tpu_custom_call.1} parent=1 // loop_footer
      %s18 = sadd.s32 1, %s14
    $region7: #{tpu_custom_call.1} parent=1 // loop_footer_branch
      %13 = sbr.rel target = $region3
    $region8: #{tpu_custom_call.1} parent=1 // loop_exit
      _
    %1958 = vsyncpa [#allocation5], 1
    %s1959 = scalar_lea.sflag [#allocation5], 1
    %1960 = vsyncpa %s1959, 1

</llo_original>
